<compile_context>
chip_gen: v6e
topology: v6e:2x2x1
jax: 0.10.0
libtpu: 0.0.40
codegen_flags: <defaults>
</compile_context>

<pallas_src>
import functools
from math import sqrt

import jax
import jax.numpy as jnp
from jax import lax
from jax.experimental import pallas as pl
from jax.experimental.pallas import tpu as pltpu


def _round_up(x, m):
    return (x + m - 1) // m * m


def _lstm_recurrence_kernel(xw_ref, whh_ref, h_out_ref, *, T):
    """Whole LSTM recurrence in a single kernel invocation.

    xw_ref   : (T, Bp, 4*Hp) f32  precomputed x @ W_ih^T + (b_ih + b_hh),
                                  gate-padded so each gate spans Hp lanes
    whh_ref  : (Hp, 4*Hp)    f32  recurrent weights, pre-transposed + padded
    h_out_ref: (Bp, Hp)      f32  h_n[-1] (last hidden state)
    """
    Bp = xw_ref.shape[1]
    Hp = whh_ref.shape[0]
    whh = whh_ref[...]  # resident weights: load into vregs once, reuse every step

    def step(t, carry):
        h, c = carry
        # Single per-step MXU op (the irreducible h @ W_hh recurrence);
        # the x projection was hoisted into xw_ref.
        gates = xw_ref[t] + jnp.dot(h, whh, preferred_element_type=jnp.float32)
        # Hp is a multiple of 128, so every gate slice starts on a vreg
        # boundary (no lane rotates / masked selects).
        i_g = jax.nn.sigmoid(gates[:, 0 * Hp:1 * Hp])
        f_g = jax.nn.sigmoid(gates[:, 1 * Hp:2 * Hp])
        g_g = jnp.tanh(gates[:, 2 * Hp:3 * Hp])
        o_g = jax.nn.sigmoid(gates[:, 3 * Hp:4 * Hp])
        c_new = f_g * c + i_g * g_g
        h_new = o_g * jnp.tanh(c_new)
        return h_new, c_new

    h0 = jnp.zeros((Bp, Hp), jnp.float32)
    c0 = jnp.zeros((Bp, Hp), jnp.float32)
    # Unroll short sequences fully so the LLO scheduler sees across steps.
    unroll = True if T <= 32 else 8
    h_n, _ = lax.fori_loop(0, T, step, (h0, c0), unroll=unroll)
    h_out_ref[...] = h_n.astype(h_out_ref.dtype)


@jax.jit
def rnn_forward(x, w_ih, w_hh, b_ih, b_hh, w_out, b_out):
    """x: (B, T, I) batch_first, matching the PyTorch module. Returns (B, O)."""
    B, T, I = x.shape
    H4 = w_ih.shape[0]
    H = H4 // 4
    Hp = _round_up(max(H, 128), 128)   # per-gate lane width -> full vregs
    Bp = _round_up(max(B, 8), 8)       # sublane-full batch

    # ---- Repack weights once (outside the recurrence) -----------------------
    # Per-gate pad H -> Hp, then pre-transpose so the contraction dim is lanes.
    w_ih_p = jnp.pad(w_ih.reshape(4, H, I), ((0, 0), (0, Hp - H), (0, 0)))
    w_ih_t = jnp.transpose(w_ih_p, (2, 0, 1)).reshape(I, 4 * Hp)       # (I, 4Hp)
    w_hh_p = jnp.pad(w_hh.reshape(4, H, H),
                     ((0, 0), (0, Hp - H), (0, Hp - H)))
    w_hh_t = jnp.transpose(w_hh_p, (2, 0, 1)).reshape(Hp, 4 * Hp)      # (Hp, 4Hp)
    b = jnp.pad((b_ih + b_hh).reshape(4, H), ((0, 0), (0, Hp - H)))
    b = b.reshape(1, 1, 4 * Hp)

    # ---- Hoist the input projection out of the recurrence -------------------
    # One matmul over all T*Bp rows instead of T tiny per-step matmuls.
    x_tm = jnp.transpose(x, (1, 0, 2)).astype(jnp.float32)             # (T, B, I)
    x_tm = jnp.pad(x_tm, ((0, 0), (0, Bp - B), (0, 0)))                # (T, Bp, I)
    xw = jnp.einsum("tbi,ig->tbg", x_tm, w_ih_t,
                    preferred_element_type=jnp.float32) + b            # (T, Bp, 4Hp)

    # ---- Single pallas_call: sequential recurrence, operands resident in VMEM
    h_n = pl.pallas_call(
        functools.partial(_lstm_recurrence_kernel, T=T),
        out_shape=jax.ShapeDtypeStruct((Bp, Hp), jnp.float32),
        in_specs=[
            pl.BlockSpec(memory_space=pltpu.MemorySpace.VMEM),  # xw  (resident)
            pl.BlockSpec(memory_space=pltpu.MemorySpace.VMEM),  # W_hh (resident)
        ],
        out_specs=pl.BlockSpec(memory_space=pltpu.MemorySpace.VMEM),
        compiler_params=pltpu.CompilerParams(
            # Explicit VMEM budget (fits v5e/v6e/v7x); at these sizes the
            # resident set is xw (T*Bp*4Hp*4B) + W_hh (Hp*4Hp*4B) << 1 MiB.
            vmem_limit_bytes=64 * 1024 * 1024,
        ),
    )(xw, w_hh_t)

    # ---- Output head (O=1, runs exactly once) -> cheap in XLA ---------------
    return h_n[:B, :H] @ w_out.T + b_out


def _reference_forward(x, w_ih, w_hh, b_ih, b_hh, w_out, b_out):
    """Pure-JAX LSTM reference (PyTorch semantics) for validation."""
    B, T, I = x.shape
    H = w_hh.shape[1]
    h = jnp.zeros((B, H), jnp.float32)
    c = jnp.zeros((B, H), jnp.float32)

    def step(carry, x_t):
        h, c = carry
        g = x_t @ w_ih.T + h @ w_hh.T + b_ih + b_hh
        i = jax.nn.sigmoid(g[:, 0 * H:1 * H])
        f = jax.nn.sigmoid(g[:, 1 * H:2 * H])
        gg = jnp.tanh(g[:, 2 * H:3 * H])
        o = jax.nn.sigmoid(g[:, 3 * H:4 * H])
        c = f * c + i * gg
        h = o * jnp.tanh(c)
        return (h, c), None

    (h, c), _ = jax.lax.scan(step, (h, c), jnp.transpose(x, (1, 0, 2)))
    return h @ w_out.T + b_out


if __name__ == "__main__":
    # Module hyperparameters (from the PyTorch __init__)
    input_size, hidden_size, output_size = 8, 64, 1
    B, T = 2, 8  # batch, sequence length

    key = jax.random.PRNGKey(0)
    ks = jax.random.split(key, 8)
    bound = 1.0 / sqrt(hidden_size)   # PyTorch LSTM/Linear default init range

    x = jax.random.normal(ks[0], (B, T, input_size), jnp.float32)
    w_ih = jax.random.uniform(ks[1], (4 * hidden_size, input_size),
                              jnp.float32, -bound, bound)
    w_hh = jax.random.uniform(ks[2], (4 * hidden_size, hidden_size),
                              jnp.float32, -bound, bound)
    b_ih = jax.random.uniform(ks[3], (4 * hidden_size,), jnp.float32, -bound, bound)
    b_hh = jax.random.uniform(ks[4], (4 * hidden_size,), jnp.float32, -bound, bound)
    w_out = jax.random.uniform(ks[5], (output_size, hidden_size),
                               jnp.float32, -bound, bound)
    b_out = jax.random.uniform(ks[6], (output_size,), jnp.float32, -bound, bound)

    # NOTE: nn.Dropout is defined in __init__ but never applied in forward(),
    # so it is intentionally omitted here.
    out = rnn_forward(x, w_ih, w_hh, b_ih, b_hh, w_out, b_out)
    out = jax.block_until_ready(out)

    ref = _reference_forward(x, w_ih, w_hh, b_ih, b_hh, w_out, b_out)
    assert out.shape == (B, output_size)
    assert jnp.allclose(out, ref, atol=1e-5, rtol=1e-5)
    print("KERNEL_OK")
</pallas_src>

<mosaic_0001>
module attributes {stable_mosaic.version = 11 : i64} {
  func.func @_lstm_recurrence_kernel(%arg0: memref<8x8x512xf32, #tpu.memory_space<vmem>>, %arg1: memref<128x512xf32, #tpu.memory_space<vmem>>, %arg2: memref<8x128xf32, #tpu.memory_space<vmem>>) attributes {dimension_semantics = [], scalar_prefetch = 0 : i64, scratch_operands = 0 : i64, tpu.core_type = #tpu.core_type<tc>} {
    %c0 = arith.constant 0 : index
    %c0_0 = arith.constant 0 : index
    %0 = vector.load %arg1[%c0, %c0_0] : memref<128x512xf32, #tpu.memory_space<vmem>>, vector<128x512xf32>
    %cst = arith.constant 0.000000e+00 : f32
    %1 = vector.broadcast %cst : f32 to vector<8x128xf32>
    %cst_1 = arith.constant 0.000000e+00 : f32
    %2 = vector.broadcast %cst_1 : f32 to vector<8x128xf32>
    %c0_i32 = arith.constant 0 : i32
    %3 = arith.index_cast %c0_i32 : i32 to index
    %c0_2 = arith.constant 0 : index
    %c0_3 = arith.constant 0 : index
    %4 = vector.load %arg0[%3, %c0_2, %c0_3] : memref<8x8x512xf32, #tpu.memory_space<vmem>>, vector<1x8x512xf32>
    %5 = vector.shape_cast %4 : vector<1x8x512xf32> to vector<8x512xf32>
    %cst_4 = arith.constant dense<0.000000e+00> : vector<8x512xf32>
    %6 = tpu.matmul %1, %0, %cst_4 {dimension_numbers = #tpu.dot_dimension_numbers<[1], [0], [0], [1], [0, 0, 1, 1], [], []>} : vector<8x128xf32>, vector<128x512xf32>, vector<8x512xf32> -> vector<8x512xf32>
    %7 = arith.addf %5, %6 : vector<8x512xf32>
    %8 = vector.extract_strided_slice %7 {offsets = [0, 0], sizes = [8, 128], strides = [1, 1]} : vector<8x512xf32> to vector<8x128xf32>
    %9 = arith.negf %8 : vector<8x128xf32>
    %10 = math.exp %9 : vector<8x128xf32>
    %cst_5 = arith.constant 1.000000e+00 : f32
    %11 = vector.broadcast %cst_5 : f32 to vector<8x128xf32>
    %12 = arith.addf %11, %10 : vector<8x128xf32>
    %13 = arith.divf %11, %12 : vector<8x128xf32>
    %14 = vector.extract_strided_slice %7 {offsets = [0, 128], sizes = [8, 128], strides = [1, 1]} : vector<8x512xf32> to vector<8x128xf32>
    %15 = arith.negf %14 : vector<8x128xf32>
    %16 = math.exp %15 : vector<8x128xf32>
    %cst_6 = arith.constant 1.000000e+00 : f32
    %17 = vector.broadcast %cst_6 : f32 to vector<8x128xf32>
    %18 = arith.addf %17, %16 : vector<8x128xf32>
    %19 = arith.divf %17, %18 : vector<8x128xf32>
    %20 = vector.extract_strided_slice %7 {offsets = [0, 256], sizes = [8, 128], strides = [1, 1]} : vector<8x512xf32> to vector<8x128xf32>
    %21 = math.tanh %20 : vector<8x128xf32>
    %22 = vector.extract_strided_slice %7 {offsets = [0, 384], sizes = [8, 128], strides = [1, 1]} : vector<8x512xf32> to vector<8x128xf32>
    %23 = arith.negf %22 : vector<8x128xf32>
    %24 = math.exp %23 : vector<8x128xf32>
    %cst_7 = arith.constant 1.000000e+00 : f32
    %25 = vector.broadcast %cst_7 : f32 to vector<8x128xf32>
    %26 = arith.addf %25, %24 : vector<8x128xf32>
    %27 = arith.divf %25, %26 : vector<8x128xf32>
    %28 = arith.mulf %19, %2 : vector<8x128xf32>
    %29 = arith.mulf %13, %21 : vector<8x128xf32>
    %30 = arith.addf %28, %29 : vector<8x128xf32>
    %31 = math.tanh %30 : vector<8x128xf32>
    %32 = arith.mulf %27, %31 : vector<8x128xf32>
    %c1_i32 = arith.constant 1 : i32
    %33 = arith.index_cast %c1_i32 : i32 to index
    %c0_8 = arith.constant 0 : index
    %c0_9 = arith.constant 0 : index
    %34 = vector.load %arg0[%33, %c0_8, %c0_9] : memref<8x8x512xf32, #tpu.memory_space<vmem>>, vector<1x8x512xf32>
    %35 = vector.shape_cast %34 : vector<1x8x512xf32> to vector<8x512xf32>
    %cst_10 = arith.constant dense<0.000000e+00> : vector<8x512xf32>
    %36 = tpu.matmul %32, %0, %cst_10 {dimension_numbers = #tpu.dot_dimension_numbers<[1], [0], [0], [1], [0, 0, 1, 1], [], []>} : vector<8x128xf32>, vector<128x512xf32>, vector<8x512xf32> -> vector<8x512xf32>
    %37 = arith.addf %35, %36 : vector<8x512xf32>
    %38 = vector.extract_strided_slice %37 {offsets = [0, 0], sizes = [8, 128], strides = [1, 1]} : vector<8x512xf32> to vector<8x128xf32>
    %39 = arith.negf %38 : vector<8x128xf32>
    %40 = math.exp %39 : vector<8x128xf32>
    %cst_11 = arith.constant 1.000000e+00 : f32
    %41 = vector.broadcast %cst_11 : f32 to vector<8x128xf32>
    %42 = arith.addf %41, %40 : vector<8x128xf32>
    %43 = arith.divf %41, %42 : vector<8x128xf32>
    %44 = vector.extract_strided_slice %37 {offsets = [0, 128], sizes = [8, 128], strides = [1, 1]} : vector<8x512xf32> to vector<8x128xf32>
    %45 = arith.negf %44 : vector<8x128xf32>
    %46 = math.exp %45 : vector<8x128xf32>
    %cst_12 = arith.constant 1.000000e+00 : f32
    %47 = vector.broadcast %cst_12 : f32 to vector<8x128xf32>
    %48 = arith.addf %47, %46 : vector<8x128xf32>
    %49 = arith.divf %47, %48 : vector<8x128xf32>
    %50 = vector.extract_strided_slice %37 {offsets = [0, 256], sizes = [8, 128], strides = [1, 1]} : vector<8x512xf32> to vector<8x128xf32>
    %51 = math.tanh %50 : vector<8x128xf32>
    %52 = vector.extract_strided_slice %37 {offsets = [0, 384], sizes = [8, 128], strides = [1, 1]} : vector<8x512xf32> to vector<8x128xf32>
    %53 = arith.negf %52 : vector<8x128xf32>
    %54 = math.exp %53 : vector<8x128xf32>
    %cst_13 = arith.constant 1.000000e+00 : f32
    %55 = vector.broadcast %cst_13 : f32 to vector<8x128xf32>
    %56 = arith.addf %55, %54 : vector<8x128xf32>
    %57 = arith.divf %55, %56 : vector<8x128xf32>
    %58 = arith.mulf %49, %30 : vector<8x128xf32>
    %59 = arith.mulf %43, %51 : vector<8x128xf32>
    %60 = arith.addf %58, %59 : vector<8x128xf32>
    %61 = math.tanh %60 : vector<8x128xf32>
    %62 = arith.mulf %57, %61 : vector<8x128xf32>
    %c2_i32 = arith.constant 2 : i32
    %63 = arith.index_cast %c2_i32 : i32 to index
    %c0_14 = arith.constant 0 : index
    %c0_15 = arith.constant 0 : index
    %64 = vector.load %arg0[%63, %c0_14, %c0_15] : memref<8x8x512xf32, #tpu.memory_space<vmem>>, vector<1x8x512xf32>
    %65 = vector.shape_cast %64 : vector<1x8x512xf32> to vector<8x512xf32>
    %cst_16 = arith.constant dense<0.000000e+00> : vector<8x512xf32>
    %66 = tpu.matmul %62, %0, %cst_16 {dimension_numbers = #tpu.dot_dimension_numbers<[1], [0], [0], [1], [0, 0, 1, 1], [], []>} : vector<8x128xf32>, vector<128x512xf32>, vector<8x512xf32> -> vector<8x512xf32>
    %67 = arith.addf %65, %66 : vector<8x512xf32>
    %68 = vector.extract_strided_slice %67 {offsets = [0, 0], sizes = [8, 128], strides = [1, 1]} : vector<8x512xf32> to vector<8x128xf32>
    %69 = arith.negf %68 : vector<8x128xf32>
    %70 = math.exp %69 : vector<8x128xf32>
    %cst_17 = arith.constant 1.000000e+00 : f32
    %71 = vector.broadcast %cst_17 : f32 to vector<8x128xf32>
    %72 = arith.addf %71, %70 : vector<8x128xf32>
    %73 = arith.divf %71, %72 : vector<8x128xf32>
    %74 = vector.extract_strided_slice %67 {offsets = [0, 128], sizes = [8, 128], strides = [1, 1]} : vector<8x512xf32> to vector<8x128xf32>
    %75 = arith.negf %74 : vector<8x128xf32>
    %76 = math.exp %75 : vector<8x128xf32>
    %cst_18 = arith.constant 1.000000e+00 : f32
    %77 = vector.broadcast %cst_18 : f32 to vector<8x128xf32>
    %78 = arith.addf %77, %76 : vector<8x128xf32>
    %79 = arith.divf %77, %78 : vector<8x128xf32>
    %80 = vector.extract_strided_slice %67 {offsets = [0, 256], sizes = [8, 128], strides = [1, 1]} : vector<8x512xf32> to vector<8x128xf32>
    %81 = math.tanh %80 : vector<8x128xf32>
    %82 = vector.extract_strided_slice %67 {offsets = [0, 384], sizes = [8, 128], strides = [1, 1]} : vector<8x512xf32> to vector<8x128xf32>
    %83 = arith.negf %82 : vector<8x128xf32>
    %84 = math.exp %83 : vector<8x128xf32>
    %cst_19 = arith.constant 1.000000e+00 : f32
    %85 = vector.broadcast %cst_19 : f32 to vector<8x128xf32>
    %86 = arith.addf %85, %84 : vector<8x128xf32>
    %87 = arith.divf %85, %86 : vector<8x128xf32>
    %88 = arith.mulf %79, %60 : vector<8x128xf32>
    %89 = arith.mulf %73, %81 : vector<8x128xf32>
    %90 = arith.addf %88, %89 : vector<8x128xf32>
    %91 = math.tanh %90 : vector<8x128xf32>
    %92 = arith.mulf %87, %91 : vector<8x128xf32>
    %c3_i32 = arith.constant 3 : i32
    %93 = arith.index_cast %c3_i32 : i32 to index
    %c0_20 = arith.constant 0 : index
    %c0_21 = arith.constant 0 : index
    %94 = vector.load %arg0[%93, %c0_20, %c0_21] : memref<8x8x512xf32, #tpu.memory_space<vmem>>, vector<1x8x512xf32>
    %95 = vector.shape_cast %94 : vector<1x8x512xf32> to vector<8x512xf32>
    %cst_22 = arith.constant dense<0.000000e+00> : vector<8x512xf32>
    %96 = tpu.matmul %92, %0, %cst_22 {dimension_numbers = #tpu.dot_dimension_numbers<[1], [0], [0], [1], [0, 0, 1, 1], [], []>} : vector<8x128xf32>, vector<128x512xf32>, vector<8x512xf32> -> vector<8x512xf32>
    %97 = arith.addf %95, %96 : vector<8x512xf32>
    %98 = vector.extract_strided_slice %97 {offsets = [0, 0], sizes = [8, 128], strides = [1, 1]} : vector<8x512xf32> to vector<8x128xf32>
    %99 = arith.negf %98 : vector<8x128xf32>
    %100 = math.exp %99 : vector<8x128xf32>
    %cst_23 = arith.constant 1.000000e+00 : f32
    %101 = vector.broadcast %cst_23 : f32 to vector<8x128xf32>
    %102 = arith.addf %101, %100 : vector<8x128xf32>
    %103 = arith.divf %101, %102 : vector<8x128xf32>
    %104 = vector.extract_strided_slice %97 {offsets = [0, 128], sizes = [8, 128], strides = [1, 1]} : vector<8x512xf32> to vector<8x128xf32>
    %105 = arith.negf %104 : vector<8x128xf32>
    %106 = math.exp %105 : vector<8x128xf32>
    %cst_24 = arith.constant 1.000000e+00 : f32
    %107 = vector.broadcast %cst_24 : f32 to vector<8x128xf32>
    %108 = arith.addf %107, %106 : vector<8x128xf32>
    %109 = arith.divf %107, %108 : vector<8x128xf32>
    %110 = vector.extract_strided_slice %97 {offsets = [0, 256], sizes = [8, 128], strides = [1, 1]} : vector<8x512xf32> to vector<8x128xf32>
    %111 = math.tanh %110 : vector<8x128xf32>
    %112 = vector.extract_strided_slice %97 {offsets = [0, 384], sizes = [8, 128], strides = [1, 1]} : vector<8x512xf32> to vector<8x128xf32>
    %113 = arith.negf %112 : vector<8x128xf32>
    %114 = math.exp %113 : vector<8x128xf32>
    %cst_25 = arith.constant 1.000000e+00 : f32
    %115 = vector.broadcast %cst_25 : f32 to vector<8x128xf32>
    %116 = arith.addf %115, %114 : vector<8x128xf32>
    %117 = arith.divf %115, %116 : vector<8x128xf32>
    %118 = arith.mulf %109, %90 : vector<8x128xf32>
    %119 = arith.mulf %103, %111 : vector<8x128xf32>
    %120 = arith.addf %118, %119 : vector<8x128xf32>
    %121 = math.tanh %120 : vector<8x128xf32>
    %122 = arith.mulf %117, %121 : vector<8x128xf32>
    %c4_i32 = arith.constant 4 : i32
    %123 = arith.index_cast %c4_i32 : i32 to index
    %c0_26 = arith.constant 0 : index
    %c0_27 = arith.constant 0 : index
    %124 = vector.load %arg0[%123, %c0_26, %c0_27] : memref<8x8x512xf32, #tpu.memory_space<vmem>>, vector<1x8x512xf32>
    %125 = vector.shape_cast %124 : vector<1x8x512xf32> to vector<8x512xf32>
    %cst_28 = arith.constant dense<0.000000e+00> : vector<8x512xf32>
    %126 = tpu.matmul %122, %0, %cst_28 {dimension_numbers = #tpu.dot_dimension_numbers<[1], [0], [0], [1], [0, 0, 1, 1], [], []>} : vector<8x128xf32>, vector<128x512xf32>, vector<8x512xf32> -> vector<8x512xf32>
    %127 = arith.addf %125, %126 : vector<8x512xf32>
    %128 = vector.extract_strided_slice %127 {offsets = [0, 0], sizes = [8, 128], strides = [1, 1]} : vector<8x512xf32> to vector<8x128xf32>
    %129 = arith.negf %128 : vector<8x128xf32>
    %130 = math.exp %129 : vector<8x128xf32>
    %cst_29 = arith.constant 1.000000e+00 : f32
    %131 = vector.broadcast %cst_29 : f32 to vector<8x128xf32>
    %132 = arith.addf %131, %130 : vector<8x128xf32>
    %133 = arith.divf %131, %132 : vector<8x128xf32>
    %134 = vector.extract_strided_slice %127 {offsets = [0, 128], sizes = [8, 128], strides = [1, 1]} : vector<8x512xf32> to vector<8x128xf32>
    %135 = arith.negf %134 : vector<8x128xf32>
    %136 = math.exp %135 : vector<8x128xf32>
    %cst_30 = arith.constant 1.000000e+00 : f32
    %137 = vector.broadcast %cst_30 : f32 to vector<8x128xf32>
    %138 = arith.addf %137, %136 : vector<8x128xf32>
    %139 = arith.divf %137, %138 : vector<8x128xf32>
    %140 = vector.extract_strided_slice %127 {offsets = [0, 256], sizes = [8, 128], strides = [1, 1]} : vector<8x512xf32> to vector<8x128xf32>
    %141 = math.tanh %140 : vector<8x128xf32>
    %142 = vector.extract_strided_slice %127 {offsets = [0, 384], sizes = [8, 128], strides = [1, 1]} : vector<8x512xf32> to vector<8x128xf32>
    %143 = arith.negf %142 : vector<8x128xf32>
    %144 = math.exp %143 : vector<8x128xf32>
    %cst_31 = arith.constant 1.000000e+00 : f32
    %145 = vector.broadcast %cst_31 : f32 to vector<8x128xf32>
    %146 = arith.addf %145, %144 : vector<8x128xf32>
    %147 = arith.divf %145, %146 : vector<8x128xf32>
    %148 = arith.mulf %139, %120 : vector<8x128xf32>
    %149 = arith.mulf %133, %141 : vector<8x128xf32>
    %150 = arith.addf %148, %149 : vector<8x128xf32>
    %151 = math.tanh %150 : vector<8x128xf32>
    %152 = arith.mulf %147, %151 : vector<8x128xf32>
    %c5_i32 = arith.constant 5 : i32
    %153 = arith.index_cast %c5_i32 : i32 to index
    %c0_32 = arith.constant 0 : index
    %c0_33 = arith.constant 0 : index
    %154 = vector.load %arg0[%153, %c0_32, %c0_33] : memref<8x8x512xf32, #tpu.memory_space<vmem>>, vector<1x8x512xf32>
    %155 = vector.shape_cast %154 : vector<1x8x512xf32> to vector<8x512xf32>
    %cst_34 = arith.constant dense<0.000000e+00> : vector<8x512xf32>
    %156 = tpu.matmul %152, %0, %cst_34 {dimension_numbers = #tpu.dot_dimension_numbers<[1], [0], [0], [1], [0, 0, 1, 1], [], []>} : vector<8x128xf32>, vector<128x512xf32>, vector<8x512xf32> -> vector<8x512xf32>
    %157 = arith.addf %155, %156 : vector<8x512xf32>
    %158 = vector.extract_strided_slice %157 {offsets = [0, 0], sizes = [8, 128], strides = [1, 1]} : vector<8x512xf32> to vector<8x128xf32>
    %159 = arith.negf %158 : vector<8x128xf32>
    %160 = math.exp %159 : vector<8x128xf32>
    %cst_35 = arith.constant 1.000000e+00 : f32
    %161 = vector.broadcast %cst_35 : f32 to vector<8x128xf32>
    %162 = arith.addf %161, %160 : vector<8x128xf32>
    %163 = arith.divf %161, %162 : vector<8x128xf32>
    %164 = vector.extract_strided_slice %157 {offsets = [0, 128], sizes = [8, 128], strides = [1, 1]} : vector<8x512xf32> to vector<8x128xf32>
    %165 = arith.negf %164 : vector<8x128xf32>
    %166 = math.exp %165 : vector<8x128xf32>
    %cst_36 = arith.constant 1.000000e+00 : f32
    %167 = vector.broadcast %cst_36 : f32 to vector<8x128xf32>
    %168 = arith.addf %167, %166 : vector<8x128xf32>
    %169 = arith.divf %167, %168 : vector<8x128xf32>
    %170 = vector.extract_strided_slice %157 {offsets = [0, 256], sizes = [8, 128], strides = [1, 1]} : vector<8x512xf32> to vector<8x128xf32>
    %171 = math.tanh %170 : vector<8x128xf32>
    %172 = vector.extract_strided_slice %157 {offsets = [0, 384], sizes = [8, 128], strides = [1, 1]} : vector<8x512xf32> to vector<8x128xf32>
    %173 = arith.negf %172 : vector<8x128xf32>
    %174 = math.exp %173 : vector<8x128xf32>
    %cst_37 = arith.constant 1.000000e+00 : f32
    %175 = vector.broadcast %cst_37 : f32 to vector<8x128xf32>
    %176 = arith.addf %175, %174 : vector<8x128xf32>
    %177 = arith.divf %175, %176 : vector<8x128xf32>
    %178 = arith.mulf %169, %150 : vector<8x128xf32>
    %179 = arith.mulf %163, %171 : vector<8x128xf32>
    %180 = arith.addf %178, %179 : vector<8x128xf32>
    %181 = math.tanh %180 : vector<8x128xf32>
    %182 = arith.mulf %177, %181 : vector<8x128xf32>
    %c6_i32 = arith.constant 6 : i32
    %183 = arith.index_cast %c6_i32 : i32 to index
    %c0_38 = arith.constant 0 : index
    %c0_39 = arith.constant 0 : index
    %184 = vector.load %arg0[%183, %c0_38, %c0_39] : memref<8x8x512xf32, #tpu.memory_space<vmem>>, vector<1x8x512xf32>
    %185 = vector.shape_cast %184 : vector<1x8x512xf32> to vector<8x512xf32>
    %cst_40 = arith.constant dense<0.000000e+00> : vector<8x512xf32>
    %186 = tpu.matmul %182, %0, %cst_40 {dimension_numbers = #tpu.dot_dimension_numbers<[1], [0], [0], [1], [0, 0, 1, 1], [], []>} : vector<8x128xf32>, vector<128x512xf32>, vector<8x512xf32> -> vector<8x512xf32>
    %187 = arith.addf %185, %186 : vector<8x512xf32>
    %188 = vector.extract_strided_slice %187 {offsets = [0, 0], sizes = [8, 128], strides = [1, 1]} : vector<8x512xf32> to vector<8x128xf32>
    %189 = arith.negf %188 : vector<8x128xf32>
    %190 = math.exp %189 : vector<8x128xf32>
    %cst_41 = arith.constant 1.000000e+00 : f32
    %191 = vector.broadcast %cst_41 : f32 to vector<8x128xf32>
    %192 = arith.addf %191, %190 : vector<8x128xf32>
    %193 = arith.divf %191, %192 : vector<8x128xf32>
    %194 = vector.extract_strided_slice %187 {offsets = [0, 128], sizes = [8, 128], strides = [1, 1]} : vector<8x512xf32> to vector<8x128xf32>
    %195 = arith.negf %194 : vector<8x128xf32>
    %196 = math.exp %195 : vector<8x128xf32>
    %cst_42 = arith.constant 1.000000e+00 : f32
    %197 = vector.broadcast %cst_42 : f32 to vector<8x128xf32>
    %198 = arith.addf %197, %196 : vector<8x128xf32>
    %199 = arith.divf %197, %198 : vector<8x128xf32>
    %200 = vector.extract_strided_slice %187 {offsets = [0, 256], sizes = [8, 128], strides = [1, 1]} : vector<8x512xf32> to vector<8x128xf32>
    %201 = math.tanh %200 : vector<8x128xf32>
    %202 = vector.extract_strided_slice %187 {offsets = [0, 384], sizes = [8, 128], strides = [1, 1]} : vector<8x512xf32> to vector<8x128xf32>
    %203 = arith.negf %202 : vector<8x128xf32>
    %204 = math.exp %203 : vector<8x128xf32>
    %cst_43 = arith.constant 1.000000e+00 : f32
    %205 = vector.broadcast %cst_43 : f32 to vector<8x128xf32>
    %206 = arith.addf %205, %204 : vector<8x128xf32>
    %207 = arith.divf %205, %206 : vector<8x128xf32>
    %208 = arith.mulf %199, %180 : vector<8x128xf32>
    %209 = arith.mulf %193, %201 : vector<8x128xf32>
    %210 = arith.addf %208, %209 : vector<8x128xf32>
    %211 = math.tanh %210 : vector<8x128xf32>
    %212 = arith.mulf %207, %211 : vector<8x128xf32>
    %c7_i32 = arith.constant 7 : i32
    %213 = arith.index_cast %c7_i32 : i32 to index
    %c0_44 = arith.constant 0 : index
    %c0_45 = arith.constant 0 : index
    %214 = vector.load %arg0[%213, %c0_44, %c0_45] : memref<8x8x512xf32, #tpu.memory_space<vmem>>, vector<1x8x512xf32>
    %215 = vector.shape_cast %214 : vector<1x8x512xf32> to vector<8x512xf32>
    %cst_46 = arith.constant dense<0.000000e+00> : vector<8x512xf32>
    %216 = tpu.matmul %212, %0, %cst_46 {dimension_numbers = #tpu.dot_dimension_numbers<[1], [0], [0], [1], [0, 0, 1, 1], [], []>} : vector<8x128xf32>, vector<128x512xf32>, vector<8x512xf32> -> vector<8x512xf32>
    %217 = arith.addf %215, %216 : vector<8x512xf32>
    %218 = vector.extract_strided_slice %217 {offsets = [0, 0], sizes = [8, 128], strides = [1, 1]} : vector<8x512xf32> to vector<8x128xf32>
    %219 = arith.negf %218 : vector<8x128xf32>
    %220 = math.exp %219 : vector<8x128xf32>
    %cst_47 = arith.constant 1.000000e+00 : f32
    %221 = vector.broadcast %cst_47 : f32 to vector<8x128xf32>
    %222 = arith.addf %221, %220 : vector<8x128xf32>
    %223 = arith.divf %221, %222 : vector<8x128xf32>
    %224 = vector.extract_strided_slice %217 {offsets = [0, 128], sizes = [8, 128], strides = [1, 1]} : vector<8x512xf32> to vector<8x128xf32>
    %225 = arith.negf %224 : vector<8x128xf32>
    %226 = math.exp %225 : vector<8x128xf32>
    %cst_48 = arith.constant 1.000000e+00 : f32
    %227 = vector.broadcast %cst_48 : f32 to vector<8x128xf32>
    %228 = arith.addf %227, %226 : vector<8x128xf32>
    %229 = arith.divf %227, %228 : vector<8x128xf32>
    %230 = vector.extract_strided_slice %217 {offsets = [0, 256], sizes = [8, 128], strides = [1, 1]} : vector<8x512xf32> to vector<8x128xf32>
    %231 = math.tanh %230 : vector<8x128xf32>
    %232 = vector.extract_strided_slice %217 {offsets = [0, 384], sizes = [8, 128], strides = [1, 1]} : vector<8x512xf32> to vector<8x128xf32>
    %233 = arith.negf %232 : vector<8x128xf32>
    %234 = math.exp %233 : vector<8x128xf32>
    %cst_49 = arith.constant 1.000000e+00 : f32
    %235 = vector.broadcast %cst_49 : f32 to vector<8x128xf32>
    %236 = arith.addf %235, %234 : vector<8x128xf32>
    %237 = arith.divf %235, %236 : vector<8x128xf32>
    %238 = arith.mulf %229, %210 : vector<8x128xf32>
    %239 = arith.mulf %223, %231 : vector<8x128xf32>
    %240 = arith.addf %238, %239 : vector<8x128xf32>
    %241 = math.tanh %240 : vector<8x128xf32>
    %242 = arith.mulf %237, %241 : vector<8x128xf32>
    %c8_i32 = arith.constant 8 : i32
    %c0_50 = arith.constant 0 : index
    %c0_51 = arith.constant 0 : index
    %243 = vector.load %arg2[%c0_50, %c0_51] : memref<8x128xf32, #tpu.memory_space<vmem>>, vector<8x128xf32>
    tpu.vector_store %arg2[%c0_50, %c0_51], %242 {strides = array<i32>} : memref<8x128xf32, #tpu.memory_space<vmem>>, vector<8x128xf32>,
    return
  }
}

</mosaic_0001>

<llo_original>
// kernel: rnn_forward.1
$region0: #{rnn_forward.1}
  #allocation0 [shape = 'u32[]', space=smem, size = 0x4, offset = 0x4, fixed_abs, tag = 'smem constant byte address 0x4 - core index']
  #allocation1 [shape = 'u32[144,128]{1,0:T(1,128)}', space=vmem, size = 0x12000, scoped, tag = 'internal scratch']
  %s0 = inlined_call_operand.vmem [shape: f32[8,8,512], index: 0, kind: input, shape index: {}]
  %s1 = inlined_call_operand.vmem [shape: f32[128,512], index: 1, kind: input, shape index: {}]
  %s2 = inlined_call_operand.vmem [shape: f32[8,128], index: 2, kind: output, shape index: {}]
  %s3 = sld [smem:[#allocation0]]
  $region18: #{rnn_forward.1} parent=0
    _
  %s5 = ssub.s32 1, %s3
  %s6 = scalar_select 0, %s5, %s3
  // Predicated region
  $region2: #{rnn_forward.1} parent=0 // pred_check
    _
  $region3: #{rnn_forward.1} parent=0 // pred_check_branch
    %8 = sbr.rel (0) target = $region5
  $region4: #{rnn_forward.1} parent=0 // pred_region
    _
  $region5: #{rnn_forward.1} parent=0 // pred_fallthru
    _
  // Predicated region
  $region6: #{rnn_forward.1} parent=0 // pred_check
    _
  $region7: #{rnn_forward.1} parent=0 // pred_check_branch
    %10 = sbr.rel (0) target = $region9
  $region8: #{rnn_forward.1} parent=0 // pred_region
    _
  $region9: #{rnn_forward.1} parent=0 // pred_fallthru
    _
  %v11 = vld [vmem:[%s1] sm:$0xff]
  %v12 = vld [vmem:[%s1 + $0x8] sm:$0xff]
  %v13 = vld [vmem:[%s1 + $0x10] sm:$0xff]
  %v14 = vld [vmem:[%s1 + $0x18] sm:$0xff]
  %v15 = vld [vmem:[%s1 + $0x20] sm:$0xff]
  %v16 = vld [vmem:[%s1 + $0x28] sm:$0xff]
  %v17 = vld [vmem:[%s1 + $0x30] sm:$0xff]
  %v18 = vld [vmem:[%s1 + $0x38] sm:$0xff]
  %v19 = vld [vmem:[%s1 + $0x40] sm:$0xff]
  %v20 = vld [vmem:[%s1 + $0x48] sm:$0xff]
  %v21 = vld [vmem:[%s1 + $0x50] sm:$0xff]
  %v22 = vld [vmem:[%s1 + $0x58] sm:$0xff]
  %v23 = vld [vmem:[%s1 + $0x60] sm:$0xff]
  %v24 = vld [vmem:[%s1 + $0x68] sm:$0xff]
  %v25 = vld [vmem:[%s1 + $0x70] sm:$0xff]
  %v26 = vld [vmem:[%s1 + $0x78] sm:$0xff]
  %v27 = vld [vmem:[%s1 + $0x80] sm:$0xff]
  %v28 = vld [vmem:[%s1 + $0x88] sm:$0xff]
  %v29 = vld [vmem:[%s1 + $0x90] sm:$0xff]
  %v30 = vld [vmem:[%s1 + $0x98] sm:$0xff]
  %v31 = vld [vmem:[%s1 + $0xa0] sm:$0xff]
  %v32 = vld [vmem:[%s1 + $0xa8] sm:$0xff]
  %v33 = vld [vmem:[%s1 + $0xb0] sm:$0xff]
  %v34 = vld [vmem:[%s1 + $0xb8] sm:$0xff]
  %v35 = vld [vmem:[%s1 + $0xc0] sm:$0xff]
  %v36 = vld [vmem:[%s1 + $0xc8] sm:$0xff]
  %v37 = vld [vmem:[%s1 + $0xd0] sm:$0xff]
  %v38 = vld [vmem:[%s1 + $0xd8] sm:$0xff]
  %v39 = vld [vmem:[%s1 + $0xe0] sm:$0xff]
  %v40 = vld [vmem:[%s1 + $0xe8] sm:$0xff]
  %v41 = vld [vmem:[%s1 + $0xf0] sm:$0xff]
  %v42 = vld [vmem:[%s1 + $0xf8] sm:$0xff]
  %v43 = vld [vmem:[%s1 + $0x100] sm:$0xff]
  %v44 = vld [vmem:[%s1 + $0x108] sm:$0xff]
  %v45 = vld [vmem:[%s1 + $0x110] sm:$0xff]
  %v46 = vld [vmem:[%s1 + $0x118] sm:$0xff]
  %v47 = vld [vmem:[%s1 + $0x120] sm:$0xff]
  %v48 = vld [vmem:[%s1 + $0x128] sm:$0xff]
  %v49 = vld [vmem:[%s1 + $0x130] sm:$0xff]
  %v50 = vld [vmem:[%s1 + $0x138] sm:$0xff]
  %v51 = vld [vmem:[%s1 + $0x140] sm:$0xff]
  %v52 = vld [vmem:[%s1 + $0x148] sm:$0xff]
  %v53 = vld [vmem:[%s1 + $0x150] sm:$0xff]
  %v54 = vld [vmem:[%s1 + $0x158] sm:$0xff]
  %v55 = vld [vmem:[%s1 + $0x160] sm:$0xff]
  %v56 = vld [vmem:[%s1 + $0x168] sm:$0xff]
  %v57 = vld [vmem:[%s1 + $0x170] sm:$0xff]
  %v58 = vld [vmem:[%s1 + $0x178] sm:$0xff]
  %v59 = vld [vmem:[%s1 + $0x180] sm:$0xff]
  %v60 = vld [vmem:[%s1 + $0x188] sm:$0xff]
  %v61 = vld [vmem:[%s1 + $0x190] sm:$0xff]
  %v62 = vld [vmem:[%s1 + $0x198] sm:$0xff]
  %v63 = vld [vmem:[%s1 + $0x1a0] sm:$0xff]
  %v64 = vld [vmem:[%s1 + $0x1a8] sm:$0xff]
  %v65 = vld [vmem:[%s1 + $0x1b0] sm:$0xff]
  %v66 = vld [vmem:[%s1 + $0x1b8] sm:$0xff]
  %v67 = vld [vmem:[%s1 + $0x1c0] sm:$0xff]
  %v68 = vld [vmem:[%s1 + $0x1c8] sm:$0xff]
  %v69 = vld [vmem:[%s1 + $0x1d0] sm:$0xff]
  %v70 = vld [vmem:[%s1 + $0x1d8] sm:$0xff]
  %v71 = vld [vmem:[%s1 + $0x1e0] sm:$0xff]
  %v72 = vld [vmem:[%s1 + $0x1e8] sm:$0xff]
  %v73 = vld [vmem:[%s1 + $0x1f0] sm:$0xff]
  %v74 = vld [vmem:[%s1 + $0x1f8] sm:$0xff]
  %v75 = vld [vmem:[%s0] sm:$0xff]
  %v76 = vld [vmem:[%s0 + $0x8] sm:$0xff]
  %v77 = vld [vmem:[%s0 + $0x10] sm:$0xff]
  %v78 = vld [vmem:[%s0 + $0x18] sm:$0xff]
  %79 = vmatprep.subr.mxu0 %v72
  %80 = vmatpush1.msra.mxu0 %v71
  %81 = vmatprep.subr.mxu0 %v68
  %82 = vmatpush1.msra.mxu0 %v67
  %83 = vmatprep.subr.mxu0 %v64
  %84 = vmatpush1.msra.mxu0 %v63
  %85 = vmatprep.subr.mxu0 %v60
  %86 = vmatpush1.msra.mxu0 %v59
  %87 = vmatprep.subr.mxu0 %v56
  %88 = vmatpush1.msra.mxu0 %v55
  %89 = vmatprep.subr.mxu0 %v52
  %90 = vmatpush1.msra.mxu0 %v51
  %91 = vmatprep.subr.mxu0 %v48
  %92 = vmatpush1.msra.mxu0 %v47
  %93 = vmatprep.subr.mxu0 %v44
  %94 = vmatpush1.msra.mxu0 %v43
  %95 = vmatprep.subr.mxu0 %v40
  %96 = vmatpush1.msra.mxu0 %v39
  %97 = vmatprep.subr.mxu0 %v36
  %98 = vmatpush1.msra.mxu0 %v35
  %99 = vmatprep.subr.mxu0 %v32
  %100 = vmatpush1.msra.mxu0 %v31
  %101 = vmatprep.subr.mxu0 %v28
  %102 = vmatpush1.msra.mxu0 %v27
  %103 = vmatprep.subr.mxu0 %v24
  %104 = vmatpush1.msra.mxu0 %v23
  %105 = vmatprep.subr.mxu0 %v20
  %106 = vmatpush1.msra.mxu0 %v19
  %107 = vmatprep.subr.mxu0 %v16
  %108 = vmatpush1.msra.mxu0 %v15
  %109 = vmatprep.subr.mxu0 %v12
  %110 = vmatpush1.msra.mxu0 %v11
  %111 = vmatprep.subr.mxu0 0.0
  %112 = vmatpush2.msra.mxu0 0.0
  %113 = vmatprep.subr.mxu0 0.0
  %114 = vmatpush2.msra.mxu0 0.0
  %115 = vmatprep.subr.mxu0 0.0
  %116 = vmatpush2.msra.mxu0 0.0
  %117 = vmatprep.subr.mxu0 0.0
  %118 = vmatpush2.msra.mxu0 0.0
  %119 = vmatprep.subr.mxu0 0.0
  %120 = vmatpush2.msra.mxu0 0.0
  %121 = vmatprep.subr.mxu0 0.0
  %122 = vmatpush2.msra.mxu0 0.0
  %123 = vmatprep.subr.mxu0 0.0
  %124 = vmatpush2.msra.mxu0 0.0
  %125 = vmatprep.subr.mxu0 0.0
  %126 = vmatpush2.msra.mxu0 0.0
  %127 = vmatprep.subr.mxu0 0.0
  %128 = vmatpush2.msra.mxu0 0.0
  %129 = vmatprep.subr.mxu0 0.0
  %130 = vmatpush2.msra.mxu0 0.0
  %131 = vmatprep.subr.mxu0 0.0
  %132 = vmatpush2.msra.mxu0 0.0
  %133 = vmatprep.subr.mxu0 0.0
  %134 = vmatpush2.msra.mxu0 0.0
  %135 = vmatprep.subr.mxu0 0.0
  %136 = vmatpush2.msra.mxu0 0.0
  %137 = vmatprep.subr.mxu0 0.0
  %138 = vmatpush2.msra.mxu0 0.0
  %139 = vmatprep.subr.mxu0 0.0
  %140 = vmatpush2.msra.mxu0 0.0
  %141 = vmatprep.subr.mxu0 0.0
  %142 = vmatpush2.msra.mxu0 0.0
  %143 = vmatprep.mubr.f32.mxu0 0.0
  %144 = vmatmul.mubr.f32.gmra.mxu0 0.0
  %v145 = vpop.f32.mrf.mxu0
  %v146 = vadd.f32 0.0, %v145
  %v147 = vpop.f32.mrf.mxu0
  %v148 = vadd.f32 0.0, %v147
  %149 = vdwg.mxu0
  %150 = vmatprep.subr.mxu0 %v74
  %151 = vmatpush1.msra.mxu0 %v73
  %152 = vmatprep.subr.mxu0 %v70
  %153 = vmatpush1.msra.mxu0 %v69
  %154 = vmatprep.subr.mxu0 %v66
  %155 = vmatpush1.msra.mxu0 %v65
  %156 = vmatprep.subr.mxu0 %v62
  %157 = vmatpush1.msra.mxu0 %v61
  %158 = vmatprep.subr.mxu0 %v58
  %159 = vmatpush1.msra.mxu0 %v57
  %160 = vmatprep.subr.mxu0 %v54
  %161 = vmatpush1.msra.mxu0 %v53
  %162 = vmatprep.subr.mxu0 %v50
  %163 = vmatpush1.msra.mxu0 %v49
  %164 = vmatprep.subr.mxu0 %v46
  %165 = vmatpush1.msra.mxu0 %v45
  %166 = vmatprep.subr.mxu0 %v42
  %167 = vmatpush1.msra.mxu0 %v41
  %168 = vmatprep.subr.mxu0 %v38
  %169 = vmatpush1.msra.mxu0 %v37
  %170 = vmatprep.subr.mxu0 %v34
  %171 = vmatpush1.msra.mxu0 %v33
  %172 = vmatprep.subr.mxu0 %v30
  %173 = vmatpush1.msra.mxu0 %v29
  %174 = vmatprep.subr.mxu0 %v26
  %175 = vmatpush1.msra.mxu0 %v25
  %176 = vmatprep.subr.mxu0 %v22
  %177 = vmatpush1.msra.mxu0 %v21
  %178 = vmatprep.subr.mxu0 %v18
  %179 = vmatpush1.msra.mxu0 %v17
  %180 = vmatprep.subr.mxu0 %v14
  %181 = vmatpush1.msra.mxu0 %v13
  %182 = vmatprep.subr.mxu0 0.0
  %183 = vmatpush2.msra.mxu0 0.0
  %184 = vmatprep.subr.mxu0 0.0
  %185 = vmatpush2.msra.mxu0 0.0
  %186 = vmatprep.subr.mxu0 0.0
  %187 = vmatpush2.msra.mxu0 0.0
  %188 = vmatprep.subr.mxu0 0.0
  %189 = vmatpush2.msra.mxu0 0.0
  %190 = vmatprep.subr.mxu0 0.0
  %191 = vmatpush2.msra.mxu0 0.0
  %192 = vmatprep.subr.mxu0 0.0
  %193 = vmatpush2.msra.mxu0 0.0
  %194 = vmatprep.subr.mxu0 0.0
  %195 = vmatpush2.msra.mxu0 0.0
  %196 = vmatprep.subr.mxu0 0.0
  %197 = vmatpush2.msra.mxu0 0.0
  %198 = vmatprep.subr.mxu0 0.0
  %199 = vmatpush2.msra.mxu0 0.0
  %200 = vmatprep.subr.mxu0 0.0
  %201 = vmatpush2.msra.mxu0 0.0
  %202 = vmatprep.subr.mxu0 0.0
  %203 = vmatpush2.msra.mxu0 0.0
  %204 = vmatprep.subr.mxu0 0.0
  %205 = vmatpush2.msra.mxu0 0.0
  %206 = vmatprep.subr.mxu0 0.0
  %207 = vmatpush2.msra.mxu0 0.0
  %208 = vmatprep.subr.mxu0 0.0
  %209 = vmatpush2.msra.mxu0 0.0
  %210 = vmatprep.subr.mxu0 0.0
  %211 = vmatpush2.msra.mxu0 0.0
  %212 = vmatprep.subr.mxu0 0.0
  %213 = vmatpush2.msra.mxu0 0.0
  %214 = vmatprep.mubr.f32.mxu0 0.0
  %215 = vmatmul.mubr.f32.gmra.mxu0 0.0
  %v216 = vpop.f32.mrf.mxu0
  %v217 = vadd.f32 0.0, %v216
  %v218 = vpop.f32.mrf.mxu0
  %v219 = vadd.f32 0.0, %v218
  %220 = vdwg.mxu0
  %v221 = vadd.f32 %v75, %v146
  %v222 = vadd.f32 %v76, %v148
  %v223 = vadd.f32 %v77, %v217
  %v224 = vadd.f32 %v78, %v219
  %v225 = vxor.u32 %v221, 2147483648
  %v226 = vmul.f32 %v225, 1.442695
  %v227 = vpow.pop %v226
  %v228 = vadd.f32 %v227, 1.0
  %v229 = vrcp.pop %v228
  %v230 = vmul.f32 1.0, %v229
  %v231 = vxor.u32 %v222, 2147483648
  %v232 = vmul.f32 %v231, 1.442695
  %v233 = vpow.pop %v232
  %v234 = vadd.f32 %v233, 1.0
  %v235 = vrcp.pop %v234
  %v236 = vmul.f32 1.0, %v235
  %v237 = vtanh.pop %v223
  %v238 = vxor.u32 %v224, 2147483648
  %v239 = vmul.f32 %v238, 1.442695
  %v240 = vpow.pop %v239
  %v241 = vadd.f32 %v240, 1.0
  %v242 = vrcp.pop %v241
  %v243 = vmul.f32 1.0, %v242
  %v244 = vmul.f32 %v236, 0.0
  %v245 = vmul.f32 %v230, %v237
  %v246 = vadd.f32 %v244, %v245
  %v247 = vtanh.pop %v246
  %v248 = vmul.f32 %v243, %v247
  %s249 = scalar_lea.vmem %s0, 32
  %v250 = vld [vmem:[%s249] sm:$0xff]
  %v251 = vld [vmem:[%s249 + $0x8] sm:$0xff]
  %v252 = vld [vmem:[%s249 + $0x10] sm:$0xff]
  %v253 = vld [vmem:[%s249 + $0x18] sm:$0xff]
  %254 = vmatprep.subr.mxu0 %v72
  %255 = vmatpush1.msra.mxu0 %v71
  %256 = vmatprep.subr.mxu0 %v68
  %257 = vmatpush1.msra.mxu0 %v67
  %258 = vmatprep.subr.mxu0 %v64
  %259 = vmatpush1.msra.mxu0 %v63
  %260 = vmatprep.subr.mxu0 %v60
  %261 = vmatpush1.msra.mxu0 %v59
  %262 = vmatprep.subr.mxu0 %v56
  %263 = vmatpush1.msra.mxu0 %v55
  %264 = vmatprep.subr.mxu0 %v52
  %265 = vmatpush1.msra.mxu0 %v51
  %266 = vmatprep.subr.mxu0 %v48
  %267 = vmatpush1.msra.mxu0 %v47
  %268 = vmatprep.subr.mxu0 %v44
  %269 = vmatpush1.msra.mxu0 %v43
  %270 = vmatprep.subr.mxu0 %v40
  %271 = vmatpush1.msra.mxu0 %v39
  %272 = vmatprep.subr.mxu0 %v36
  %273 = vmatpush1.msra.mxu0 %v35
  %274 = vmatprep.subr.mxu0 %v32
  %275 = vmatpush1.msra.mxu0 %v31
  %276 = vmatprep.subr.mxu0 %v28
  %277 = vmatpush1.msra.mxu0 %v27
  %278 = vmatprep.subr.mxu0 %v24
  %279 = vmatpush1.msra.mxu0 %v23
  %280 = vmatprep.subr.mxu0 %v20
  %281 = vmatpush1.msra.mxu0 %v19
  %282 = vmatprep.subr.mxu0 %v16
  %283 = vmatpush1.msra.mxu0 %v15
  %284 = vmatprep.subr.mxu0 %v12
  %285 = vmatpush1.msra.mxu0 %v11
  %286 = vmatprep.subr.mxu0 0.0
  %287 = vmatpush2.msra.mxu0 0.0
  %288 = vmatprep.subr.mxu0 0.0
  %289 = vmatpush2.msra.mxu0 0.0
  %290 = vmatprep.subr.mxu0 0.0
  %291 = vmatpush2.msra.mxu0 0.0
  %292 = vmatprep.subr.mxu0 0.0
  %293 = vmatpush2.msra.mxu0 0.0
  %294 = vmatprep.subr.mxu0 0.0
  %295 = vmatpush2.msra.mxu0 0.0
  %296 = vmatprep.subr.mxu0 0.0
  %297 = vmatpush2.msra.mxu0 0.0
  %298 = vmatprep.subr.mxu0 0.0
  %299 = vmatpush2.msra.mxu0 0.0
  %300 = vmatprep.subr.mxu0 0.0
  %301 = vmatpush2.msra.mxu0 0.0
  %302 = vmatprep.subr.mxu0 0.0
  %303 = vmatpush2.msra.mxu0 0.0
  %304 = vmatprep.subr.mxu0 0.0
  %305 = vmatpush2.msra.mxu0 0.0
  %306 = vmatprep.subr.mxu0 0.0
  %307 = vmatpush2.msra.mxu0 0.0
  %308 = vmatprep.subr.mxu0 0.0
  %309 = vmatpush2.msra.mxu0 0.0
  %310 = vmatprep.subr.mxu0 0.0
  %311 = vmatpush2.msra.mxu0 0.0
  %312 = vmatprep.subr.mxu0 0.0
  %313 = vmatpush2.msra.mxu0 0.0
  %314 = vmatprep.subr.mxu0 0.0
  %315 = vmatpush2.msra.mxu0 0.0
  %316 = vmatprep.subr.mxu0 0.0
  %317 = vmatpush2.msra.mxu0 0.0
  %318 = vmatprep.mubr.f32.mxu0 0.0
  %319 = vmatmul.mubr.f32.gmra.mxu0 %v248
  %v320 = vpop.f32.mrf.mxu0
  %v321 = vadd.f32 0.0, %v320
  %v322 = vpop.f32.mrf.mxu0
  %v323 = vadd.f32 0.0, %v322
  %324 = vdwg.mxu0
  %325 = vmatprep.subr.mxu0 %v74
  %326 = vmatpush1.msra.mxu0 %v73
  %327 = vmatprep.subr.mxu0 %v70
  %328 = vmatpush1.msra.mxu0 %v69
  %329 = vmatprep.subr.mxu0 %v66
  %330 = vmatpush1.msra.mxu0 %v65
  %331 = vmatprep.subr.mxu0 %v62
  %332 = vmatpush1.msra.mxu0 %v61
  %333 = vmatprep.subr.mxu0 %v58
  %334 = vmatpush1.msra.mxu0 %v57
  %335 = vmatprep.subr.mxu0 %v54
  %336 = vmatpush1.msra.mxu0 %v53
  %337 = vmatprep.subr.mxu0 %v50
  %338 = vmatpush1.msra.mxu0 %v49
  %339 = vmatprep.subr.mxu0 %v46
  %340 = vmatpush1.msra.mxu0 %v45
  %341 = vmatprep.subr.mxu0 %v42
  %342 = vmatpush1.msra.mxu0 %v41
  %343 = vmatprep.subr.mxu0 %v38
  %344 = vmatpush1.msra.mxu0 %v37
  %345 = vmatprep.subr.mxu0 %v34
  %346 = vmatpush1.msra.mxu0 %v33
  %347 = vmatprep.subr.mxu0 %v30
  %348 = vmatpush1.msra.mxu0 %v29
  %349 = vmatprep.subr.mxu0 %v26
  %350 = vmatpush1.msra.mxu0 %v25
  %351 = vmatprep.subr.mxu0 %v22
  %352 = vmatpush1.msra.mxu0 %v21
  %353 = vmatprep.subr.mxu0 %v18
  %354 = vmatpush1.msra.mxu0 %v17
  %355 = vmatprep.subr.mxu0 %v14
  %356 = vmatpush1.msra.mxu0 %v13
  %357 = vmatprep.subr.mxu0 0.0
  %358 = vmatpush2.msra.mxu0 0.0
  %359 = vmatprep.subr.mxu0 0.0
  %360 = vmatpush2.msra.mxu0 0.0
  %361 = vmatprep.subr.mxu0 0.0
  %362 = vmatpush2.msra.mxu0 0.0
  %363 = vmatprep.subr.mxu0 0.0
  %364 = vmatpush2.msra.mxu0 0.0
  %365 = vmatprep.subr.mxu0 0.0
  %366 = vmatpush2.msra.mxu0 0.0
  %367 = vmatprep.subr.mxu0 0.0
  %368 = vmatpush2.msra.mxu0 0.0
  %369 = vmatprep.subr.mxu0 0.0
  %370 = vmatpush2.msra.mxu0 0.0
  %371 = vmatprep.subr.mxu0 0.0
  %372 = vmatpush2.msra.mxu0 0.0
  %373 = vmatprep.subr.mxu0 0.0
  %374 = vmatpush2.msra.mxu0 0.0
  %375 = vmatprep.subr.mxu0 0.0
  %376 = vmatpush2.msra.mxu0 0.0
  %377 = vmatprep.subr.mxu0 0.0
  %378 = vmatpush2.msra.mxu0 0.0
  %379 = vmatprep.subr.mxu0 0.0
  %380 = vmatpush2.msra.mxu0 0.0
  %381 = vmatprep.subr.mxu0 0.0
  %382 = vmatpush2.msra.mxu0 0.0
  %383 = vmatprep.subr.mxu0 0.0
  %384 = vmatpush2.msra.mxu0 0.0
  %385 = vmatprep.subr.mxu0 0.0
  %386 = vmatpush2.msra.mxu0 0.0
  %387 = vmatprep.subr.mxu0 0.0
  %388 = vmatpush2.msra.mxu0 0.0
  %389 = vmatprep.mubr.f32.mxu0 0.0
  %390 = vmatmul.mubr.f32.gmra.mxu0 %v248
  %v391 = vpop.f32.mrf.mxu0
  %v392 = vadd.f32 0.0, %v391
  %v393 = vpop.f32.mrf.mxu0
  %v394 = vadd.f32 0.0, %v393
  %395 = vdwg.mxu0
  %v396 = vadd.f32 %v250, %v321
  %v397 = vadd.f32 %v251, %v323
  %v398 = vadd.f32 %v252, %v392
  %v399 = vadd.f32 %v253, %v394
  %v400 = vxor.u32 %v396, 2147483648
  %v401 = vmul.f32 %v400, 1.442695
  %v402 = vpow.pop %v401
  %v403 = vadd.f32 %v402, 1.0
  %v404 = vrcp.pop %v403
  %v405 = vmul.f32 1.0, %v404
  %v406 = vxor.u32 %v397, 2147483648
  %v407 = vmul.f32 %v406, 1.442695
  %v408 = vpow.pop %v407
  %v409 = vadd.f32 %v408, 1.0
  %v410 = vrcp.pop %v409
  %v411 = vmul.f32 1.0, %v410
  %v412 = vtanh.pop %v398
  %v413 = vxor.u32 %v399, 2147483648
  %v414 = vmul.f32 %v413, 1.442695
  %v415 = vpow.pop %v414
  %v416 = vadd.f32 %v415, 1.0
  %v417 = vrcp.pop %v416
  %v418 = vmul.f32 1.0, %v417
  %v419 = vmul.f32 %v411, %v246
  %v420 = vmul.f32 %v405, %v412
  %v421 = vadd.f32 %v419, %v420
  %v422 = vtanh.pop %v421
  %v423 = vmul.f32 %v418, %v422
  %s424 = scalar_lea.vmem %s0, 64
  %v425 = vld [vmem:[%s424] sm:$0xff]
  %v426 = vld [vmem:[%s424 + $0x8] sm:$0xff]
  %v427 = vld [vmem:[%s424 + $0x10] sm:$0xff]
  %v428 = vld [vmem:[%s424 + $0x18] sm:$0xff]
  %429 = vmatprep.subr.mxu0 %v72
  %430 = vmatpush1.msra.mxu0 %v71
  %431 = vmatprep.subr.mxu0 %v68
  %432 = vmatpush1.msra.mxu0 %v67
  %433 = vmatprep.subr.mxu0 %v64
  %434 = vmatpush1.msra.mxu0 %v63
  %435 = vmatprep.subr.mxu0 %v60
  %436 = vmatpush1.msra.mxu0 %v59
  %437 = vmatprep.subr.mxu0 %v56
  %438 = vmatpush1.msra.mxu0 %v55
  %439 = vmatprep.subr.mxu0 %v52
  %440 = vmatpush1.msra.mxu0 %v51
  %441 = vmatprep.subr.mxu0 %v48
  %442 = vmatpush1.msra.mxu0 %v47
  %443 = vmatprep.subr.mxu0 %v44
  %444 = vmatpush1.msra.mxu0 %v43
  %445 = vmatprep.subr.mxu0 %v40
  %446 = vmatpush1.msra.mxu0 %v39
  %447 = vmatprep.subr.mxu0 %v36
  %448 = vmatpush1.msra.mxu0 %v35
  %449 = vmatprep.subr.mxu0 %v32
  %450 = vmatpush1.msra.mxu0 %v31
  %451 = vmatprep.subr.mxu0 %v28
  %452 = vmatpush1.msra.mxu0 %v27
  %453 = vmatprep.subr.mxu0 %v24
  %454 = vmatpush1.msra.mxu0 %v23
  %455 = vmatprep.subr.mxu0 %v20
  %456 = vmatpush1.msra.mxu0 %v19
  %457 = vmatprep.subr.mxu0 %v16
  %458 = vmatpush1.msra.mxu0 %v15
  %459 = vmatprep.subr.mxu0 %v12
  %460 = vmatpush1.msra.mxu0 %v11
  %461 = vmatprep.subr.mxu0 0.0
  %462 = vmatpush2.msra.mxu0 0.0
  %463 = vmatprep.subr.mxu0 0.0
  %464 = vmatpush2.msra.mxu0 0.0
  %465 = vmatprep.subr.mxu0 0.0
  %466 = vmatpush2.msra.mxu0 0.0
  %467 = vmatprep.subr.mxu0 0.0
  %468 = vmatpush2.msra.mxu0 0.0
  %469 = vmatprep.subr.mxu0 0.0
  %470 = vmatpush2.msra.mxu0 0.0
  %471 = vmatprep.subr.mxu0 0.0
  %472 = vmatpush2.msra.mxu0 0.0
  %473 = vmatprep.subr.mxu0 0.0
  %474 = vmatpush2.msra.mxu0 0.0
  %475 = vmatprep.subr.mxu0 0.0
  %476 = vmatpush2.msra.mxu0 0.0
  %477 = vmatprep.subr.mxu0 0.0
  %478 = vmatpush2.msra.mxu0 0.0
  %479 = vmatprep.subr.mxu0 0.0
  %480 = vmatpush2.msra.mxu0 0.0
  %481 = vmatprep.subr.mxu0 0.0
  %482 = vmatpush2.msra.mxu0 0.0
  %483 = vmatprep.subr.mxu0 0.0
  %484 = vmatpush2.msra.mxu0 0.0
  %485 = vmatprep.subr.mxu0 0.0
  %486 = vmatpush2.msra.mxu0 0.0
  %487 = vmatprep.subr.mxu0 0.0
  %488 = vmatpush2.msra.mxu0 0.0
  %489 = vmatprep.subr.mxu0 0.0
  %490 = vmatpush2.msra.mxu0 0.0
  %491 = vmatprep.subr.mxu0 0.0
  %492 = vmatpush2.msra.mxu0 0.0
  %493 = vmatprep.mubr.f32.mxu0 0.0
  %494 = vmatmul.mubr.f32.gmra.mxu0 %v423
  %v495 = vpop.f32.mrf.mxu0
  %v496 = vadd.f32 0.0, %v495
  %v497 = vpop.f32.mrf.mxu0
  %v498 = vadd.f32 0.0, %v497
  %499 = vdwg.mxu0
  %500 = vmatprep.subr.mxu0 %v74
  %501 = vmatpush1.msra.mxu0 %v73
  %502 = vmatprep.subr.mxu0 %v70
  %503 = vmatpush1.msra.mxu0 %v69
  %504 = vmatprep.subr.mxu0 %v66
  %505 = vmatpush1.msra.mxu0 %v65
  %506 = vmatprep.subr.mxu0 %v62
  %507 = vmatpush1.msra.mxu0 %v61
  %508 = vmatprep.subr.mxu0 %v58
  %509 = vmatpush1.msra.mxu0 %v57
  %510 = vmatprep.subr.mxu0 %v54
  %511 = vmatpush1.msra.mxu0 %v53
  %512 = vmatprep.subr.mxu0 %v50
  %513 = vmatpush1.msra.mxu0 %v49
  %514 = vmatprep.subr.mxu0 %v46
  %515 = vmatpush1.msra.mxu0 %v45
  %516 = vmatprep.subr.mxu0 %v42
  %517 = vmatpush1.msra.mxu0 %v41
  %518 = vmatprep.subr.mxu0 %v38
  %519 = vmatpush1.msra.mxu0 %v37
  %520 = vmatprep.subr.mxu0 %v34
  %521 = vmatpush1.msra.mxu0 %v33
  %522 = vmatprep.subr.mxu0 %v30
  %523 = vmatpush1.msra.mxu0 %v29
  %524 = vmatprep.subr.mxu0 %v26
  %525 = vmatpush1.msra.mxu0 %v25
  %526 = vmatprep.subr.mxu0 %v22
  %527 = vmatpush1.msra.mxu0 %v21
  %528 = vmatprep.subr.mxu0 %v18
  %529 = vmatpush1.msra.mxu0 %v17
  %530 = vmatprep.subr.mxu0 %v14
  %531 = vmatpush1.msra.mxu0 %v13
  %532 = vmatprep.subr.mxu0 0.0
  %533 = vmatpush2.msra.mxu0 0.0
  %534 = vmatprep.subr.mxu0 0.0
  %535 = vmatpush2.msra.mxu0 0.0
  %536 = vmatprep.subr.mxu0 0.0
  %537 = vmatpush2.msra.mxu0 0.0
  %538 = vmatprep.subr.mxu0 0.0
  %539 = vmatpush2.msra.mxu0 0.0
  %540 = vmatprep.subr.mxu0 0.0
  %541 = vmatpush2.msra.mxu0 0.0
  %542 = vmatprep.subr.mxu0 0.0
  %543 = vmatpush2.msra.mxu0 0.0
  %544 = vmatprep.subr.mxu0 0.0
  %545 = vmatpush2.msra.mxu0 0.0
  %546 = vmatprep.subr.mxu0 0.0
  %547 = vmatpush2.msra.mxu0 0.0
  %548 = vmatprep.subr.mxu0 0.0
  %549 = vmatpush2.msra.mxu0 0.0
  %550 = vmatprep.subr.mxu0 0.0
  %551 = vmatpush2.msra.mxu0 0.0
  %552 = vmatprep.subr.mxu0 0.0
  %553 = vmatpush2.msra.mxu0 0.0
  %554 = vmatprep.subr.mxu0 0.0
  %555 = vmatpush2.msra.mxu0 0.0
  %556 = vmatprep.subr.mxu0 0.0
  %557 = vmatpush2.msra.mxu0 0.0
  %558 = vmatprep.subr.mxu0 0.0
  %559 = vmatpush2.msra.mxu0 0.0
  %560 = vmatprep.subr.mxu0 0.0
  %561 = vmatpush2.msra.mxu0 0.0
  %562 = vmatprep.subr.mxu0 0.0
  %563 = vmatpush2.msra.mxu0 0.0
  %564 = vmatprep.mubr.f32.mxu0 0.0
  %565 = vmatmul.mubr.f32.gmra.mxu0 %v423
  %v566 = vpop.f32.mrf.mxu0
  %v567 = vadd.f32 0.0, %v566
  %v568 = vpop.f32.mrf.mxu0
  %v569 = vadd.f32 0.0, %v568
  %570 = vdwg.mxu0
  %v571 = vadd.f32 %v425, %v496
  %v572 = vadd.f32 %v426, %v498
  %v573 = vadd.f32 %v427, %v567
  %v574 = vadd.f32 %v428, %v569
  %v575 = vxor.u32 %v571, 2147483648
  %v576 = vmul.f32 %v575, 1.442695
  %v577 = vpow.pop %v576
  %v578 = vadd.f32 %v577, 1.0
  %v579 = vrcp.pop %v578
  %v580 = vmul.f32 1.0, %v579
  %v581 = vxor.u32 %v572, 2147483648
  %v582 = vmul.f32 %v581, 1.442695
  %v583 = vpow.pop %v582
  %v584 = vadd.f32 %v583, 1.0
  %v585 = vrcp.pop %v584
  %v586 = vmul.f32 1.0, %v585
  %v587 = vtanh.pop %v573
  %v588 = vxor.u32 %v574, 2147483648
  %v589 = vmul.f32 %v588, 1.442695
  %v590 = vpow.pop %v589
  %v591 = vadd.f32 %v590, 1.0
  %v592 = vrcp.pop %v591
  %v593 = vmul.f32 1.0, %v592
  %v594 = vmul.f32 %v586, %v421
  %v595 = vmul.f32 %v580, %v587
  %v596 = vadd.f32 %v594, %v595
  %v597 = vtanh.pop %v596
  %v598 = vmul.f32 %v593, %v597
  %s599 = scalar_lea.vmem %s0, 96
  %v600 = vld [vmem:[%s599] sm:$0xff]
  %v601 = vld [vmem:[%s599 + $0x8] sm:$0xff]
  %v602 = vld [vmem:[%s599 + $0x10] sm:$0xff]
  %v603 = vld [vmem:[%s599 + $0x18] sm:$0xff]
  %604 = vmatprep.subr.mxu0 %v72
  %605 = vmatpush1.msra.mxu0 %v71
  %606 = vmatprep.subr.mxu0 %v68
  %607 = vmatpush1.msra.mxu0 %v67
  %608 = vmatprep.subr.mxu0 %v64
  %609 = vmatpush1.msra.mxu0 %v63
  %610 = vmatprep.subr.mxu0 %v60
  %611 = vmatpush1.msra.mxu0 %v59
  %612 = vmatprep.subr.mxu0 %v56
  %613 = vmatpush1.msra.mxu0 %v55
  %614 = vmatprep.subr.mxu0 %v52
  %615 = vmatpush1.msra.mxu0 %v51
  %616 = vmatprep.subr.mxu0 %v48
  %617 = vmatpush1.msra.mxu0 %v47
  %618 = vmatprep.subr.mxu0 %v44
  %619 = vmatpush1.msra.mxu0 %v43
  %620 = vmatprep.subr.mxu0 %v40
  %621 = vmatpush1.msra.mxu0 %v39
  %622 = vmatprep.subr.mxu0 %v36
  %623 = vmatpush1.msra.mxu0 %v35
  %624 = vmatprep.subr.mxu0 %v32
  %625 = vmatpush1.msra.mxu0 %v31
  %626 = vmatprep.subr.mxu0 %v28
  %627 = vmatpush1.msra.mxu0 %v27
  %628 = vmatprep.subr.mxu0 %v24
  %629 = vmatpush1.msra.mxu0 %v23
  %630 = vmatprep.subr.mxu0 %v20
  %631 = vmatpush1.msra.mxu0 %v19
  %632 = vmatprep.subr.mxu0 %v16
  %633 = vmatpush1.msra.mxu0 %v15
  %634 = vmatprep.subr.mxu0 %v12
  %635 = vmatpush1.msra.mxu0 %v11
  %636 = vmatprep.subr.mxu0 0.0
  %637 = vmatpush2.msra.mxu0 0.0
  %638 = vmatprep.subr.mxu0 0.0
  %639 = vmatpush2.msra.mxu0 0.0
  %640 = vmatprep.subr.mxu0 0.0
  %641 = vmatpush2.msra.mxu0 0.0
  %642 = vmatprep.subr.mxu0 0.0
  %643 = vmatpush2.msra.mxu0 0.0
  %644 = vmatprep.subr.mxu0 0.0
  %645 = vmatpush2.msra.mxu0 0.0
  %646 = vmatprep.subr.mxu0 0.0
  %647 = vmatpush2.msra.mxu0 0.0
  %648 = vmatprep.subr.mxu0 0.0
  %649 = vmatpush2.msra.mxu0 0.0
  %650 = vmatprep.subr.mxu0 0.0
  %651 = vmatpush2.msra.mxu0 0.0
  %652 = vmatprep.subr.mxu0 0.0
  %653 = vmatpush2.msra.mxu0 0.0
  %654 = vmatprep.subr.mxu0 0.0
  %655 = vmatpush2.msra.mxu0 0.0
  %656 = vmatprep.subr.mxu0 0.0
  %657 = vmatpush2.msra.mxu0 0.0
  %658 = vmatprep.subr.mxu0 0.0
  %659 = vmatpush2.msra.mxu0 0.0
  %660 = vmatprep.subr.mxu0 0.0
  %661 = vmatpush2.msra.mxu0 0.0
  %662 = vmatprep.subr.mxu0 0.0
  %663 = vmatpush2.msra.mxu0 0.0
  %664 = vmatprep.subr.mxu0 0.0
  %665 = vmatpush2.msra.mxu0 0.0
  %666 = vmatprep.subr.mxu0 0.0
  %667 = vmatpush2.msra.mxu0 0.0
  %668 = vmatprep.mubr.f32.mxu0 0.0
  %669 = vmatmul.mubr.f32.gmra.mxu0 %v598
  %v670 = vpop.f32.mrf.mxu0
  %v671 = vadd.f32 0.0, %v670
  %v672 = vpop.f32.mrf.mxu0
  %v673 = vadd.f32 0.0, %v672
  %674 = vdwg.mxu0
  %675 = vmatprep.subr.mxu0 %v74
  %676 = vmatpush1.msra.mxu0 %v73
  %677 = vmatprep.subr.mxu0 %v70
  %678 = vmatpush1.msra.mxu0 %v69
  %679 = vmatprep.subr.mxu0 %v66
  %680 = vmatpush1.msra.mxu0 %v65
  %681 = vmatprep.subr.mxu0 %v62
  %682 = vmatpush1.msra.mxu0 %v61
  %683 = vmatprep.subr.mxu0 %v58
  %684 = vmatpush1.msra.mxu0 %v57
  %685 = vmatprep.subr.mxu0 %v54
  %686 = vmatpush1.msra.mxu0 %v53
  %687 = vmatprep.subr.mxu0 %v50
  %688 = vmatpush1.msra.mxu0 %v49
  %689 = vmatprep.subr.mxu0 %v46
  %690 = vmatpush1.msra.mxu0 %v45
  %691 = vmatprep.subr.mxu0 %v42
  %692 = vmatpush1.msra.mxu0 %v41
  %693 = vmatprep.subr.mxu0 %v38
  %694 = vmatpush1.msra.mxu0 %v37
  %695 = vmatprep.subr.mxu0 %v34
  %696 = vmatpush1.msra.mxu0 %v33
  %697 = vmatprep.subr.mxu0 %v30
  %698 = vmatpush1.msra.mxu0 %v29
  %699 = vmatprep.subr.mxu0 %v26
  %700 = vmatpush1.msra.mxu0 %v25
  %701 = vmatprep.subr.mxu0 %v22
  %702 = vmatpush1.msra.mxu0 %v21
  %703 = vmatprep.subr.mxu0 %v18
  %704 = vmatpush1.msra.mxu0 %v17
  %705 = vmatprep.subr.mxu0 %v14
  %706 = vmatpush1.msra.mxu0 %v13
  %707 = vmatprep.subr.mxu0 0.0
  %708 = vmatpush2.msra.mxu0 0.0
  %709 = vmatprep.subr.mxu0 0.0
  %710 = vmatpush2.msra.mxu0 0.0
  %711 = vmatprep.subr.mxu0 0.0
  %712 = vmatpush2.msra.mxu0 0.0
  %713 = vmatprep.subr.mxu0 0.0
  %714 = vmatpush2.msra.mxu0 0.0
  %715 = vmatprep.subr.mxu0 0.0
  %716 = vmatpush2.msra.mxu0 0.0
  %717 = vmatprep.subr.mxu0 0.0
  %718 = vmatpush2.msra.mxu0 0.0
  %719 = vmatprep.subr.mxu0 0.0
  %720 = vmatpush2.msra.mxu0 0.0
  %721 = vmatprep.subr.mxu0 0.0
  %722 = vmatpush2.msra.mxu0 0.0
  %723 = vmatprep.subr.mxu0 0.0
  %724 = vmatpush2.msra.mxu0 0.0
  %725 = vmatprep.subr.mxu0 0.0
  %726 = vmatpush2.msra.mxu0 0.0
  %727 = vmatprep.subr.mxu0 0.0
  %728 = vmatpush2.msra.mxu0 0.0
  %729 = vmatprep.subr.mxu0 0.0
  %730 = vmatpush2.msra.mxu0 0.0
  %731 = vmatprep.subr.mxu0 0.0
  %732 = vmatpush2.msra.mxu0 0.0
  %733 = vmatprep.subr.mxu0 0.0
  %734 = vmatpush2.msra.mxu0 0.0
  %735 = vmatprep.subr.mxu0 0.0
  %736 = vmatpush2.msra.mxu0 0.0
  %737 = vmatprep.subr.mxu0 0.0
  %738 = vmatpush2.msra.mxu0 0.0
  %739 = vmatprep.mubr.f32.mxu0 0.0
  %740 = vmatmul.mubr.f32.gmra.mxu0 %v598
  %v741 = vpop.f32.mrf.mxu0
  %v742 = vadd.f32 0.0, %v741
  %v743 = vpop.f32.mrf.mxu0
  %v744 = vadd.f32 0.0, %v743
  %745 = vdwg.mxu0
  %v746 = vadd.f32 %v600, %v671
  %v747 = vadd.f32 %v601, %v673
  %v748 = vadd.f32 %v602, %v742
  %v749 = vadd.f32 %v603, %v744
  %v750 = vxor.u32 %v746, 2147483648
  %v751 = vmul.f32 %v750, 1.442695
  %v752 = vpow.pop %v751
  %v753 = vadd.f32 %v752, 1.0
  %v754 = vrcp.pop %v753
  %v755 = vmul.f32 1.0, %v754
  %v756 = vxor.u32 %v747, 2147483648
  %v757 = vmul.f32 %v756, 1.442695
  %v758 = vpow.pop %v757
  %v759 = vadd.f32 %v758, 1.0
  %v760 = vrcp.pop %v759
  %v761 = vmul.f32 1.0, %v760
  %v762 = vtanh.pop %v748
  %v763 = vxor.u32 %v749, 2147483648
  %v764 = vmul.f32 %v763, 1.442695
  %v765 = vpow.pop %v764
  %v766 = vadd.f32 %v765, 1.0
  %v767 = vrcp.pop %v766
  %v768 = vmul.f32 1.0, %v767
  %v769 = vmul.f32 %v761, %v596
  %v770 = vmul.f32 %v755, %v762
  %v771 = vadd.f32 %v769, %v770
  %v772 = vtanh.pop %v771
  %v773 = vmul.f32 %v768, %v772
  %s774 = scalar_lea.vmem %s0, 128
  %v775 = vld [vmem:[%s774] sm:$0xff]
  %v776 = vld [vmem:[%s774 + $0x8] sm:$0xff]
  %v777 = vld [vmem:[%s774 + $0x10] sm:$0xff]
  %v778 = vld [vmem:[%s774 + $0x18] sm:$0xff]
  %779 = vmatprep.subr.mxu0 %v72
  %780 = vmatpush1.msra.mxu0 %v71
  %781 = vmatprep.subr.mxu0 %v68
  %782 = vmatpush1.msra.mxu0 %v67
  %783 = vmatprep.subr.mxu0 %v64
  %784 = vmatpush1.msra.mxu0 %v63
  %785 = vmatprep.subr.mxu0 %v60
  %786 = vmatpush1.msra.mxu0 %v59
  %787 = vmatprep.subr.mxu0 %v56
  %788 = vmatpush1.msra.mxu0 %v55
  %789 = vmatprep.subr.mxu0 %v52
  %790 = vmatpush1.msra.mxu0 %v51
  %791 = vmatprep.subr.mxu0 %v48
  %792 = vmatpush1.msra.mxu0 %v47
  %793 = vmatprep.subr.mxu0 %v44
  %794 = vmatpush1.msra.mxu0 %v43
  %795 = vmatprep.subr.mxu0 %v40
  %796 = vmatpush1.msra.mxu0 %v39
  %797 = vmatprep.subr.mxu0 %v36
  %798 = vmatpush1.msra.mxu0 %v35
  %799 = vmatprep.subr.mxu0 %v32
  %800 = vmatpush1.msra.mxu0 %v31
  %801 = vmatprep.subr.mxu0 %v28
  %802 = vmatpush1.msra.mxu0 %v27
  %803 = vmatprep.subr.mxu0 %v24
  %804 = vmatpush1.msra.mxu0 %v23
  %805 = vmatprep.subr.mxu0 %v20
  %806 = vmatpush1.msra.mxu0 %v19
  %807 = vmatprep.subr.mxu0 %v16
  %808 = vmatpush1.msra.mxu0 %v15
  %809 = vmatprep.subr.mxu0 %v12
  %810 = vmatpush1.msra.mxu0 %v11
  %811 = vmatprep.subr.mxu0 0.0
  %812 = vmatpush2.msra.mxu0 0.0
  %813 = vmatprep.subr.mxu0 0.0
  %814 = vmatpush2.msra.mxu0 0.0
  %815 = vmatprep.subr.mxu0 0.0
  %816 = vmatpush2.msra.mxu0 0.0
  %817 = vmatprep.subr.mxu0 0.0
  %818 = vmatpush2.msra.mxu0 0.0
  %819 = vmatprep.subr.mxu0 0.0
  %820 = vmatpush2.msra.mxu0 0.0
  %821 = vmatprep.subr.mxu0 0.0
  %822 = vmatpush2.msra.mxu0 0.0
  %823 = vmatprep.subr.mxu0 0.0
  %824 = vmatpush2.msra.mxu0 0.0
  %825 = vmatprep.subr.mxu0 0.0
  %826 = vmatpush2.msra.mxu0 0.0
  %827 = vmatprep.subr.mxu0 0.0
  %828 = vmatpush2.msra.mxu0 0.0
  %829 = vmatprep.subr.mxu0 0.0
  %830 = vmatpush2.msra.mxu0 0.0
  %831 = vmatprep.subr.mxu0 0.0
  %832 = vmatpush2.msra.mxu0 0.0
  %833 = vmatprep.subr.mxu0 0.0
  %834 = vmatpush2.msra.mxu0 0.0
  %835 = vmatprep.subr.mxu0 0.0
  %836 = vmatpush2.msra.mxu0 0.0
  %837 = vmatprep.subr.mxu0 0.0
  %838 = vmatpush2.msra.mxu0 0.0
  %839 = vmatprep.subr.mxu0 0.0
  %840 = vmatpush2.msra.mxu0 0.0
  %841 = vmatprep.subr.mxu0 0.0
  %842 = vmatpush2.msra.mxu0 0.0
  %843 = vmatprep.mubr.f32.mxu0 0.0
  %844 = vmatmul.mubr.f32.gmra.mxu0 %v773
  %v845 = vpop.f32.mrf.mxu0
  %v846 = vadd.f32 0.0, %v845
  %v847 = vpop.f32.mrf.mxu0
  %v848 = vadd.f32 0.0, %v847
  %849 = vdwg.mxu0
  %850 = vmatprep.subr.mxu0 %v74
  %851 = vmatpush1.msra.mxu0 %v73
  %852 = vmatprep.subr.mxu0 %v70
  %853 = vmatpush1.msra.mxu0 %v69
  %854 = vmatprep.subr.mxu0 %v66
  %855 = vmatpush1.msra.mxu0 %v65
  %856 = vmatprep.subr.mxu0 %v62
  %857 = vmatpush1.msra.mxu0 %v61
  %858 = vmatprep.subr.mxu0 %v58
  %859 = vmatpush1.msra.mxu0 %v57
  %860 = vmatprep.subr.mxu0 %v54
  %861 = vmatpush1.msra.mxu0 %v53
  %862 = vmatprep.subr.mxu0 %v50
  %863 = vmatpush1.msra.mxu0 %v49
  %864 = vmatprep.subr.mxu0 %v46
  %865 = vmatpush1.msra.mxu0 %v45
  %866 = vmatprep.subr.mxu0 %v42
  %867 = vmatpush1.msra.mxu0 %v41
  %868 = vmatprep.subr.mxu0 %v38
  %869 = vmatpush1.msra.mxu0 %v37
  %870 = vmatprep.subr.mxu0 %v34
  %871 = vmatpush1.msra.mxu0 %v33
  %872 = vmatprep.subr.mxu0 %v30
  %873 = vmatpush1.msra.mxu0 %v29
  %874 = vmatprep.subr.mxu0 %v26
  %875 = vmatpush1.msra.mxu0 %v25
  %876 = vmatprep.subr.mxu0 %v22
  %877 = vmatpush1.msra.mxu0 %v21
  %878 = vmatprep.subr.mxu0 %v18
  %879 = vmatpush1.msra.mxu0 %v17
  %880 = vmatprep.subr.mxu0 %v14
  %881 = vmatpush1.msra.mxu0 %v13
  %882 = vmatprep.subr.mxu0 0.0
  %883 = vmatpush2.msra.mxu0 0.0
  %884 = vmatprep.subr.mxu0 0.0
  %885 = vmatpush2.msra.mxu0 0.0
  %886 = vmatprep.subr.mxu0 0.0
  %887 = vmatpush2.msra.mxu0 0.0
  %888 = vmatprep.subr.mxu0 0.0
  %889 = vmatpush2.msra.mxu0 0.0
  %890 = vmatprep.subr.mxu0 0.0
  %891 = vmatpush2.msra.mxu0 0.0
  %892 = vmatprep.subr.mxu0 0.0
  %893 = vmatpush2.msra.mxu0 0.0
  %894 = vmatprep.subr.mxu0 0.0
  %895 = vmatpush2.msra.mxu0 0.0
  %896 = vmatprep.subr.mxu0 0.0
  %897 = vmatpush2.msra.mxu0 0.0
  %898 = vmatprep.subr.mxu0 0.0
  %899 = vmatpush2.msra.mxu0 0.0
  %900 = vmatprep.subr.mxu0 0.0
  %901 = vmatpush2.msra.mxu0 0.0
  %902 = vmatprep.subr.mxu0 0.0
  %903 = vmatpush2.msra.mxu0 0.0
  %904 = vmatprep.subr.mxu0 0.0
  %905 = vmatpush2.msra.mxu0 0.0
  %906 = vmatprep.subr.mxu0 0.0
  %907 = vmatpush2.msra.mxu0 0.0
  %908 = vmatprep.subr.mxu0 0.0
  %909 = vmatpush2.msra.mxu0 0.0
  %910 = vmatprep.subr.mxu0 0.0
  %911 = vmatpush2.msra.mxu0 0.0
  %912 = vmatprep.subr.mxu0 0.0
  %913 = vmatpush2.msra.mxu0 0.0
  %914 = vmatprep.mubr.f32.mxu0 0.0
  %915 = vmatmul.mubr.f32.gmra.mxu0 %v773
  %v916 = vpop.f32.mrf.mxu0
  %v917 = vadd.f32 0.0, %v916
  %v918 = vpop.f32.mrf.mxu0
  %v919 = vadd.f32 0.0, %v918
  %920 = vdwg.mxu0
  %v921 = vadd.f32 %v775, %v846
  %v922 = vadd.f32 %v776, %v848
  %v923 = vadd.f32 %v777, %v917
  %v924 = vadd.f32 %v778, %v919
  %v925 = vxor.u32 %v921, 2147483648
  %v926 = vmul.f32 %v925, 1.442695
  %v927 = vpow.pop %v926
  %v928 = vadd.f32 %v927, 1.0
  %v929 = vrcp.pop %v928
  %v930 = vmul.f32 1.0, %v929
  %v931 = vxor.u32 %v922, 2147483648
  %v932 = vmul.f32 %v931, 1.442695
  %v933 = vpow.pop %v932
  %v934 = vadd.f32 %v933, 1.0
  %v935 = vrcp.pop %v934
  %v936 = vmul.f32 1.0, %v935
  %v937 = vtanh.pop %v923
  %v938 = vxor.u32 %v924, 2147483648
  %v939 = vmul.f32 %v938, 1.442695
  %v940 = vpow.pop %v939
  %v941 = vadd.f32 %v940, 1.0
  %v942 = vrcp.pop %v941
  %v943 = vmul.f32 1.0, %v942
  %v944 = vmul.f32 %v936, %v771
  %v945 = vmul.f32 %v930, %v937
  %v946 = vadd.f32 %v944, %v945
  %v947 = vtanh.pop %v946
  %v948 = vmul.f32 %v943, %v947
  %s949 = scalar_lea.vmem %s0, 160
  %v950 = vld [vmem:[%s949] sm:$0xff]
  %v951 = vld [vmem:[%s949 + $0x8] sm:$0xff]
  %v952 = vld [vmem:[%s949 + $0x10] sm:$0xff]
  %v953 = vld [vmem:[%s949 + $0x18] sm:$0xff]
  %954 = vmatprep.subr.mxu0 %v72
  %955 = vmatpush1.msra.mxu0 %v71
  %956 = vmatprep.subr.mxu0 %v68
  %957 = vmatpush1.msra.mxu0 %v67
  %958 = vmatprep.subr.mxu0 %v64
  %959 = vmatpush1.msra.mxu0 %v63
  %960 = vmatprep.subr.mxu0 %v60
  %961 = vmatpush1.msra.mxu0 %v59
  %962 = vmatprep.subr.mxu0 %v56
  %963 = vmatpush1.msra.mxu0 %v55
  %964 = vmatprep.subr.mxu0 %v52
  %965 = vmatpush1.msra.mxu0 %v51
  %966 = vmatprep.subr.mxu0 %v48
  %967 = vmatpush1.msra.mxu0 %v47
  %968 = vmatprep.subr.mxu0 %v44
  %969 = vmatpush1.msra.mxu0 %v43
  %970 = vmatprep.subr.mxu0 %v40
  %971 = vmatpush1.msra.mxu0 %v39
  %972 = vmatprep.subr.mxu0 %v36
  %973 = vmatpush1.msra.mxu0 %v35
  %974 = vmatprep.subr.mxu0 %v32
  %975 = vmatpush1.msra.mxu0 %v31
  %976 = vmatprep.subr.mxu0 %v28
  %977 = vmatpush1.msra.mxu0 %v27
  %978 = vmatprep.subr.mxu0 %v24
  %979 = vmatpush1.msra.mxu0 %v23
  %980 = vmatprep.subr.mxu0 %v20
  %981 = vmatpush1.msra.mxu0 %v19
  %982 = vmatprep.subr.mxu0 %v16
  %983 = vmatpush1.msra.mxu0 %v15
  %984 = vmatprep.subr.mxu0 %v12
  %985 = vmatpush1.msra.mxu0 %v11
  %986 = vmatprep.subr.mxu0 0.0
  %987 = vmatpush2.msra.mxu0 0.0
  %988 = vmatprep.subr.mxu0 0.0
  %989 = vmatpush2.msra.mxu0 0.0
  %990 = vmatprep.subr.mxu0 0.0
  %991 = vmatpush2.msra.mxu0 0.0
  %992 = vmatprep.subr.mxu0 0.0
  %993 = vmatpush2.msra.mxu0 0.0
  %994 = vmatprep.subr.mxu0 0.0
  %995 = vmatpush2.msra.mxu0 0.0
  %996 = vmatprep.subr.mxu0 0.0
  %997 = vmatpush2.msra.mxu0 0.0
  %998 = vmatprep.subr.mxu0 0.0
  %999 = vmatpush2.msra.mxu0 0.0
  %1000 = vmatprep.subr.mxu0 0.0
  %1001 = vmatpush2.msra.mxu0 0.0
  %1002 = vmatprep.subr.mxu0 0.0
  %1003 = vmatpush2.msra.mxu0 0.0
  %1004 = vmatprep.subr.mxu0 0.0
  %1005 = vmatpush2.msra.mxu0 0.0
  %1006 = vmatprep.subr.mxu0 0.0
  %1007 = vmatpush2.msra.mxu0 0.0
  %1008 = vmatprep.subr.mxu0 0.0
  %1009 = vmatpush2.msra.mxu0 0.0
  %1010 = vmatprep.subr.mxu0 0.0
  %1011 = vmatpush2.msra.mxu0 0.0
  %1012 = vmatprep.subr.mxu0 0.0
  %1013 = vmatpush2.msra.mxu0 0.0
  %1014 = vmatprep.subr.mxu0 0.0
  %1015 = vmatpush2.msra.mxu0 0.0
  %1016 = vmatprep.subr.mxu0 0.0
  %1017 = vmatpush2.msra.mxu0 0.0
  %1018 = vmatprep.mubr.f32.mxu0 0.0
  %1019 = vmatmul.mubr.f32.gmra.mxu0 %v948
  %v1020 = vpop.f32.mrf.mxu0
  %v1021 = vadd.f32 0.0, %v1020
  %v1022 = vpop.f32.mrf.mxu0
  %v1023 = vadd.f32 0.0, %v1022
  %1024 = vdwg.mxu0
  %1025 = vmatprep.subr.mxu0 %v74
  %1026 = vmatpush1.msra.mxu0 %v73
  %1027 = vmatprep.subr.mxu0 %v70
  %1028 = vmatpush1.msra.mxu0 %v69
  %1029 = vmatprep.subr.mxu0 %v66
  %1030 = vmatpush1.msra.mxu0 %v65
  %1031 = vmatprep.subr.mxu0 %v62
  %1032 = vmatpush1.msra.mxu0 %v61
  %1033 = vmatprep.subr.mxu0 %v58
  %1034 = vmatpush1.msra.mxu0 %v57
  %1035 = vmatprep.subr.mxu0 %v54
  %1036 = vmatpush1.msra.mxu0 %v53
  %1037 = vmatprep.subr.mxu0 %v50
  %1038 = vmatpush1.msra.mxu0 %v49
  %1039 = vmatprep.subr.mxu0 %v46
  %1040 = vmatpush1.msra.mxu0 %v45
  %1041 = vmatprep.subr.mxu0 %v42
  %1042 = vmatpush1.msra.mxu0 %v41
  %1043 = vmatprep.subr.mxu0 %v38
  %1044 = vmatpush1.msra.mxu0 %v37
  %1045 = vmatprep.subr.mxu0 %v34
  %1046 = vmatpush1.msra.mxu0 %v33
  %1047 = vmatprep.subr.mxu0 %v30
  %1048 = vmatpush1.msra.mxu0 %v29
  %1049 = vmatprep.subr.mxu0 %v26
  %1050 = vmatpush1.msra.mxu0 %v25
  %1051 = vmatprep.subr.mxu0 %v22
  %1052 = vmatpush1.msra.mxu0 %v21
  %1053 = vmatprep.subr.mxu0 %v18
  %1054 = vmatpush1.msra.mxu0 %v17
  %1055 = vmatprep.subr.mxu0 %v14
  %1056 = vmatpush1.msra.mxu0 %v13
  %1057 = vmatprep.subr.mxu0 0.0
  %1058 = vmatpush2.msra.mxu0 0.0
  %1059 = vmatprep.subr.mxu0 0.0
  %1060 = vmatpush2.msra.mxu0 0.0
  %1061 = vmatprep.subr.mxu0 0.0
  %1062 = vmatpush2.msra.mxu0 0.0
  %1063 = vmatprep.subr.mxu0 0.0
  %1064 = vmatpush2.msra.mxu0 0.0
  %1065 = vmatprep.subr.mxu0 0.0
  %1066 = vmatpush2.msra.mxu0 0.0
  %1067 = vmatprep.subr.mxu0 0.0
  %1068 = vmatpush2.msra.mxu0 0.0
  %1069 = vmatprep.subr.mxu0 0.0
  %1070 = vmatpush2.msra.mxu0 0.0
  %1071 = vmatprep.subr.mxu0 0.0
  %1072 = vmatpush2.msra.mxu0 0.0
  %1073 = vmatprep.subr.mxu0 0.0
  %1074 = vmatpush2.msra.mxu0 0.0
  %1075 = vmatprep.subr.mxu0 0.0
  %1076 = vmatpush2.msra.mxu0 0.0
  %1077 = vmatprep.subr.mxu0 0.0
  %1078 = vmatpush2.msra.mxu0 0.0
  %1079 = vmatprep.subr.mxu0 0.0
  %1080 = vmatpush2.msra.mxu0 0.0
  %1081 = vmatprep.subr.mxu0 0.0
  %1082 = vmatpush2.msra.mxu0 0.0
  %1083 = vmatprep.subr.mxu0 0.0
  %1084 = vmatpush2.msra.mxu0 0.0
  %1085 = vmatprep.subr.mxu0 0.0
  %1086 = vmatpush2.msra.mxu0 0.0
  %1087 = vmatprep.subr.mxu0 0.0
  %1088 = vmatpush2.msra.mxu0 0.0
  %1089 = vmatprep.mubr.f32.mxu0 0.0
  %1090 = vmatmul.mubr.f32.gmra.mxu0 %v948
  %v1091 = vpop.f32.mrf.mxu0
  %v1092 = vadd.f32 0.0, %v1091
  %v1093 = vpop.f32.mrf.mxu0
  %v1094 = vadd.f32 0.0, %v1093
  %1095 = vdwg.mxu0
  %v1096 = vadd.f32 %v950, %v1021
  %v1097 = vadd.f32 %v951, %v1023
  %v1098 = vadd.f32 %v952, %v1092
  %v1099 = vadd.f32 %v953, %v1094
  %v1100 = vxor.u32 %v1096, 2147483648
  %v1101 = vmul.f32 %v1100, 1.442695
  %v1102 = vpow.pop %v1101
  %v1103 = vadd.f32 %v1102, 1.0
  %v1104 = vrcp.pop %v1103
  %v1105 = vmul.f32 1.0, %v1104
  %v1106 = vxor.u32 %v1097, 2147483648
  %v1107 = vmul.f32 %v1106, 1.442695
  %v1108 = vpow.pop %v1107
  %v1109 = vadd.f32 %v1108, 1.0
  %v1110 = vrcp.pop %v1109
  %v1111 = vmul.f32 1.0, %v1110
  %v1112 = vtanh.pop %v1098
  %v1113 = vxor.u32 %v1099, 2147483648
  %v1114 = vmul.f32 %v1113, 1.442695
  %v1115 = vpow.pop %v1114
  %v1116 = vadd.f32 %v1115, 1.0
  %v1117 = vrcp.pop %v1116
  %v1118 = vmul.f32 1.0, %v1117
  %v1119 = vmul.f32 %v1111, %v946
  %v1120 = vmul.f32 %v1105, %v1112
  %v1121 = vadd.f32 %v1119, %v1120
  %v1122 = vtanh.pop %v1121
  %v1123 = vmul.f32 %v1118, %v1122
  %s1124 = scalar_lea.vmem %s0, 192
  %v1125 = vld [vmem:[%s1124] sm:$0xff]
  %v1126 = vld [vmem:[%s1124 + $0x8] sm:$0xff]
  %v1127 = vld [vmem:[%s1124 + $0x10] sm:$0xff]
  %v1128 = vld [vmem:[%s1124 + $0x18] sm:$0xff]
  %1129 = vmatprep.subr.mxu0 %v72
  %1130 = vmatpush1.msra.mxu0 %v71
  %1131 = vmatprep.subr.mxu0 %v68
  %1132 = vmatpush1.msra.mxu0 %v67
  %1133 = vmatprep.subr.mxu0 %v64
  %1134 = vmatpush1.msra.mxu0 %v63
  %1135 = vmatprep.subr.mxu0 %v60
  %1136 = vmatpush1.msra.mxu0 %v59
  %1137 = vmatprep.subr.mxu0 %v56
  %1138 = vmatpush1.msra.mxu0 %v55
  %1139 = vmatprep.subr.mxu0 %v52
  %1140 = vmatpush1.msra.mxu0 %v51
  %1141 = vmatprep.subr.mxu0 %v48
  %1142 = vmatpush1.msra.mxu0 %v47
  %1143 = vmatprep.subr.mxu0 %v44
  %1144 = vmatpush1.msra.mxu0 %v43
  %1145 = vmatprep.subr.mxu0 %v40
  %1146 = vmatpush1.msra.mxu0 %v39
  %1147 = vmatprep.subr.mxu0 %v36
  %1148 = vmatpush1.msra.mxu0 %v35
  %1149 = vmatprep.subr.mxu0 %v32
  %1150 = vmatpush1.msra.mxu0 %v31
  %1151 = vmatprep.subr.mxu0 %v28
  %1152 = vmatpush1.msra.mxu0 %v27
  %1153 = vmatprep.subr.mxu0 %v24
  %1154 = vmatpush1.msra.mxu0 %v23
  %1155 = vmatprep.subr.mxu0 %v20
  %1156 = vmatpush1.msra.mxu0 %v19
  %1157 = vmatprep.subr.mxu0 %v16
  %1158 = vmatpush1.msra.mxu0 %v15
  %1159 = vmatprep.subr.mxu0 %v12
  %1160 = vmatpush1.msra.mxu0 %v11
  %1161 = vmatprep.subr.mxu0 0.0
  %1162 = vmatpush2.msra.mxu0 0.0
  %1163 = vmatprep.subr.mxu0 0.0
  %1164 = vmatpush2.msra.mxu0 0.0
  %1165 = vmatprep.subr.mxu0 0.0
  %1166 = vmatpush2.msra.mxu0 0.0
  %1167 = vmatprep.subr.mxu0 0.0
  %1168 = vmatpush2.msra.mxu0 0.0
  %1169 = vmatprep.subr.mxu0 0.0
  %1170 = vmatpush2.msra.mxu0 0.0
  %1171 = vmatprep.subr.mxu0 0.0
  %1172 = vmatpush2.msra.mxu0 0.0
  %1173 = vmatprep.subr.mxu0 0.0
  %1174 = vmatpush2.msra.mxu0 0.0
  %1175 = vmatprep.subr.mxu0 0.0
  %1176 = vmatpush2.msra.mxu0 0.0
  %1177 = vmatprep.subr.mxu0 0.0
  %1178 = vmatpush2.msra.mxu0 0.0
  %1179 = vmatprep.subr.mxu0 0.0
  %1180 = vmatpush2.msra.mxu0 0.0
  %1181 = vmatprep.subr.mxu0 0.0
  %1182 = vmatpush2.msra.mxu0 0.0
  %1183 = vmatprep.subr.mxu0 0.0
  %1184 = vmatpush2.msra.mxu0 0.0
  %1185 = vmatprep.subr.mxu0 0.0
  %1186 = vmatpush2.msra.mxu0 0.0
  %1187 = vmatprep.subr.mxu0 0.0
  %1188 = vmatpush2.msra.mxu0 0.0
  %1189 = vmatprep.subr.mxu0 0.0
  %1190 = vmatpush2.msra.mxu0 0.0
  %1191 = vmatprep.subr.mxu0 0.0
  %1192 = vmatpush2.msra.mxu0 0.0
  %1193 = vmatprep.mubr.f32.mxu0 0.0
  %1194 = vmatmul.mubr.f32.gmra.mxu0 %v1123
  %v1195 = vpop.f32.mrf.mxu0
  %v1196 = vadd.f32 0.0, %v1195
  %v1197 = vpop.f32.mrf.mxu0
  %v1198 = vadd.f32 0.0, %v1197
  %1199 = vdwg.mxu0
  %1200 = vmatprep.subr.mxu0 %v74
  %1201 = vmatpush1.msra.mxu0 %v73
  %1202 = vmatprep.subr.mxu0 %v70
  %1203 = vmatpush1.msra.mxu0 %v69
  %1204 = vmatprep.subr.mxu0 %v66
  %1205 = vmatpush1.msra.mxu0 %v65
  %1206 = vmatprep.subr.mxu0 %v62
  %1207 = vmatpush1.msra.mxu0 %v61
  %1208 = vmatprep.subr.mxu0 %v58
  %1209 = vmatpush1.msra.mxu0 %v57
  %1210 = vmatprep.subr.mxu0 %v54
  %1211 = vmatpush1.msra.mxu0 %v53
  %1212 = vmatprep.subr.mxu0 %v50
  %1213 = vmatpush1.msra.mxu0 %v49
  %1214 = vmatprep.subr.mxu0 %v46
  %1215 = vmatpush1.msra.mxu0 %v45
  %1216 = vmatprep.subr.mxu0 %v42
  %1217 = vmatpush1.msra.mxu0 %v41
  %1218 = vmatprep.subr.mxu0 %v38
  %1219 = vmatpush1.msra.mxu0 %v37
  %1220 = vmatprep.subr.mxu0 %v34
  %1221 = vmatpush1.msra.mxu0 %v33
  %1222 = vmatprep.subr.mxu0 %v30
  %1223 = vmatpush1.msra.mxu0 %v29
  %1224 = vmatprep.subr.mxu0 %v26
  %1225 = vmatpush1.msra.mxu0 %v25
  %1226 = vmatprep.subr.mxu0 %v22
  %1227 = vmatpush1.msra.mxu0 %v21
  %1228 = vmatprep.subr.mxu0 %v18
  %1229 = vmatpush1.msra.mxu0 %v17
  %1230 = vmatprep.subr.mxu0 %v14
  %1231 = vmatpush1.msra.mxu0 %v13
  %1232 = vmatprep.subr.mxu0 0.0
  %1233 = vmatpush2.msra.mxu0 0.0
  %1234 = vmatprep.subr.mxu0 0.0
  %1235 = vmatpush2.msra.mxu0 0.0
  %1236 = vmatprep.subr.mxu0 0.0
  %1237 = vmatpush2.msra.mxu0 0.0
  %1238 = vmatprep.subr.mxu0 0.0
  %1239 = vmatpush2.msra.mxu0 0.0
  %1240 = vmatprep.subr.mxu0 0.0
  %1241 = vmatpush2.msra.mxu0 0.0
  %1242 = vmatprep.subr.mxu0 0.0
  %1243 = vmatpush2.msra.mxu0 0.0
  %1244 = vmatprep.subr.mxu0 0.0
  %1245 = vmatpush2.msra.mxu0 0.0
  %1246 = vmatprep.subr.mxu0 0.0
  %1247 = vmatpush2.msra.mxu0 0.0
  %1248 = vmatprep.subr.mxu0 0.0
  %1249 = vmatpush2.msra.mxu0 0.0
  %1250 = vmatprep.subr.mxu0 0.0
  %1251 = vmatpush2.msra.mxu0 0.0
  %1252 = vmatprep.subr.mxu0 0.0
  %1253 = vmatpush2.msra.mxu0 0.0
  %1254 = vmatprep.subr.mxu0 0.0
  %1255 = vmatpush2.msra.mxu0 0.0
  %1256 = vmatprep.subr.mxu0 0.0
  %1257 = vmatpush2.msra.mxu0 0.0
  %1258 = vmatprep.subr.mxu0 0.0
  %1259 = vmatpush2.msra.mxu0 0.0
  %1260 = vmatprep.subr.mxu0 0.0
  %1261 = vmatpush2.msra.mxu0 0.0
  %1262 = vmatprep.subr.mxu0 0.0
  %1263 = vmatpush2.msra.mxu0 0.0
  %1264 = vmatprep.mubr.f32.mxu0 0.0
  %1265 = vmatmul.mubr.f32.gmra.mxu0 %v1123
  %v1266 = vpop.f32.mrf.mxu0
  %v1267 = vadd.f32 0.0, %v1266
  %v1268 = vpop.f32.mrf.mxu0
  %v1269 = vadd.f32 0.0, %v1268
  %1270 = vdwg.mxu0
  %v1271 = vadd.f32 %v1125, %v1196
  %v1272 = vadd.f32 %v1126, %v1198
  %v1273 = vadd.f32 %v1127, %v1267
  %v1274 = vadd.f32 %v1128, %v1269
  %v1275 = vxor.u32 %v1271, 2147483648
  %v1276 = vmul.f32 %v1275, 1.442695
  %v1277 = vpow.pop %v1276
  %v1278 = vadd.f32 %v1277, 1.0
  %v1279 = vrcp.pop %v1278
  %v1280 = vmul.f32 1.0, %v1279
  %v1281 = vxor.u32 %v1272, 2147483648
  %v1282 = vmul.f32 %v1281, 1.442695
  %v1283 = vpow.pop %v1282
  %v1284 = vadd.f32 %v1283, 1.0
  %v1285 = vrcp.pop %v1284
  %v1286 = vmul.f32 1.0, %v1285
  %v1287 = vtanh.pop %v1273
  %v1288 = vxor.u32 %v1274, 2147483648
  %v1289 = vmul.f32 %v1288, 1.442695
  %v1290 = vpow.pop %v1289
  %v1291 = vadd.f32 %v1290, 1.0
  %v1292 = vrcp.pop %v1291
  %v1293 = vmul.f32 1.0, %v1292
  %v1294 = vmul.f32 %v1286, %v1121
  %v1295 = vmul.f32 %v1280, %v1287
  %v1296 = vadd.f32 %v1294, %v1295
  %v1297 = vtanh.pop %v1296
  %v1298 = vmul.f32 %v1293, %v1297
  %s1299 = scalar_lea.vmem %s0, 224
  %v1300 = vld [vmem:[%s1299] sm:$0xff]
  %v1301 = vld [vmem:[%s1299 + $0x8] sm:$0xff]
  %v1302 = vld [vmem:[%s1299 + $0x10] sm:$0xff]
  %v1303 = vld [vmem:[%s1299 + $0x18] sm:$0xff]
  %1304 = vmatprep.subr.mxu0 %v72
  %1305 = vmatpush1.msra.mxu0 %v71
  %1306 = vmatprep.subr.mxu0 %v68
  %1307 = vmatpush1.msra.mxu0 %v67
  %1308 = vmatprep.subr.mxu0 %v64
  %1309 = vmatpush1.msra.mxu0 %v63
  %1310 = vmatprep.subr.mxu0 %v60
  %1311 = vmatpush1.msra.mxu0 %v59
  %1312 = vmatprep.subr.mxu0 %v56
  %1313 = vmatpush1.msra.mxu0 %v55
  %1314 = vmatprep.subr.mxu0 %v52
  %1315 = vmatpush1.msra.mxu0 %v51
  %1316 = vmatprep.subr.mxu0 %v48
  %1317 = vmatpush1.msra.mxu0 %v47
  %1318 = vmatprep.subr.mxu0 %v44
  %1319 = vmatpush1.msra.mxu0 %v43
  %1320 = vmatprep.subr.mxu0 %v40
  %1321 = vmatpush1.msra.mxu0 %v39
  %1322 = vmatprep.subr.mxu0 %v36
  %1323 = vmatpush1.msra.mxu0 %v35
  %1324 = vmatprep.subr.mxu0 %v32
  %1325 = vmatpush1.msra.mxu0 %v31
  %1326 = vmatprep.subr.mxu0 %v28
  %1327 = vmatpush1.msra.mxu0 %v27
  %1328 = vmatprep.subr.mxu0 %v24
  %1329 = vmatpush1.msra.mxu0 %v23
  %1330 = vmatprep.subr.mxu0 %v20
  %1331 = vmatpush1.msra.mxu0 %v19
  %1332 = vmatprep.subr.mxu0 %v16
  %1333 = vmatpush1.msra.mxu0 %v15
  %1334 = vmatprep.subr.mxu0 %v12
  %1335 = vmatpush1.msra.mxu0 %v11
  %1336 = vmatprep.subr.mxu0 0.0
  %1337 = vmatpush2.msra.mxu0 0.0
  %1338 = vmatprep.subr.mxu0 0.0
  %1339 = vmatpush2.msra.mxu0 0.0
  %1340 = vmatprep.subr.mxu0 0.0
  %1341 = vmatpush2.msra.mxu0 0.0
  %1342 = vmatprep.subr.mxu0 0.0
  %1343 = vmatpush2.msra.mxu0 0.0
  %1344 = vmatprep.subr.mxu0 0.0
  %1345 = vmatpush2.msra.mxu0 0.0
  %1346 = vmatprep.subr.mxu0 0.0
  %1347 = vmatpush2.msra.mxu0 0.0
  %1348 = vmatprep.subr.mxu0 0.0
  %1349 = vmatpush2.msra.mxu0 0.0
  %1350 = vmatprep.subr.mxu0 0.0
  %1351 = vmatpush2.msra.mxu0 0.0
  %1352 = vmatprep.subr.mxu0 0.0
  %1353 = vmatpush2.msra.mxu0 0.0
  %1354 = vmatprep.subr.mxu0 0.0
  %1355 = vmatpush2.msra.mxu0 0.0
  %1356 = vmatprep.subr.mxu0 0.0
  %1357 = vmatpush2.msra.mxu0 0.0
  %1358 = vmatprep.subr.mxu0 0.0
  %1359 = vmatpush2.msra.mxu0 0.0
  %1360 = vmatprep.subr.mxu0 0.0
  %1361 = vmatpush2.msra.mxu0 0.0
  %1362 = vmatprep.subr.mxu0 0.0
  %1363 = vmatpush2.msra.mxu0 0.0
  %1364 = vmatprep.subr.mxu0 0.0
  %1365 = vmatpush2.msra.mxu0 0.0
  %1366 = vmatprep.subr.mxu0 0.0
  %1367 = vmatpush2.msra.mxu0 0.0
  %1368 = vmatprep.mubr.f32.mxu0 0.0
  %1369 = vmatmul.mubr.f32.gmra.mxu0 %v1298
  %v1370 = vpop.f32.mrf.mxu0
  %v1371 = vadd.f32 0.0, %v1370
  %v1372 = vpop.f32.mrf.mxu0
  %v1373 = vadd.f32 0.0, %v1372
  %1374 = vdwg.mxu0
  %1375 = vmatprep.subr.mxu0 %v74
  %1376 = vmatpush1.msra.mxu0 %v73
  %1377 = vmatprep.subr.mxu0 %v70
  %1378 = vmatpush1.msra.mxu0 %v69
  %1379 = vmatprep.subr.mxu0 %v66
  %1380 = vmatpush1.msra.mxu0 %v65
  %1381 = vmatprep.subr.mxu0 %v62
  %1382 = vmatpush1.msra.mxu0 %v61
  %1383 = vmatprep.subr.mxu0 %v58
  %1384 = vmatpush1.msra.mxu0 %v57
  %1385 = vmatprep.subr.mxu0 %v54
  %1386 = vmatpush1.msra.mxu0 %v53
  %1387 = vmatprep.subr.mxu0 %v50
  %1388 = vmatpush1.msra.mxu0 %v49
  %1389 = vmatprep.subr.mxu0 %v46
  %1390 = vmatpush1.msra.mxu0 %v45
  %1391 = vmatprep.subr.mxu0 %v42
  %1392 = vmatpush1.msra.mxu0 %v41
  %1393 = vmatprep.subr.mxu0 %v38
  %1394 = vmatpush1.msra.mxu0 %v37
  %1395 = vmatprep.subr.mxu0 %v34
  %1396 = vmatpush1.msra.mxu0 %v33
  %1397 = vmatprep.subr.mxu0 %v30
  %1398 = vmatpush1.msra.mxu0 %v29
  %1399 = vmatprep.subr.mxu0 %v26
  %1400 = vmatpush1.msra.mxu0 %v25
  %1401 = vmatprep.subr.mxu0 %v22
  %1402 = vmatpush1.msra.mxu0 %v21
  %1403 = vmatprep.subr.mxu0 %v18
  %1404 = vmatpush1.msra.mxu0 %v17
  %1405 = vmatprep.subr.mxu0 %v14
  %1406 = vmatpush1.msra.mxu0 %v13
  %1407 = vmatprep.subr.mxu0 0.0
  %1408 = vmatpush2.msra.mxu0 0.0
  %1409 = vmatprep.subr.mxu0 0.0
  %1410 = vmatpush2.msra.mxu0 0.0
  %1411 = vmatprep.subr.mxu0 0.0
  %1412 = vmatpush2.msra.mxu0 0.0
  %1413 = vmatprep.subr.mxu0 0.0
  %1414 = vmatpush2.msra.mxu0 0.0
  %1415 = vmatprep.subr.mxu0 0.0
  %1416 = vmatpush2.msra.mxu0 0.0
  %1417 = vmatprep.subr.mxu0 0.0
  %1418 = vmatpush2.msra.mxu0 0.0
  %1419 = vmatprep.subr.mxu0 0.0
  %1420 = vmatpush2.msra.mxu0 0.0
  %1421 = vmatprep.subr.mxu0 0.0
  %1422 = vmatpush2.msra.mxu0 0.0
  %1423 = vmatprep.subr.mxu0 0.0
  %1424 = vmatpush2.msra.mxu0 0.0
  %1425 = vmatprep.subr.mxu0 0.0
  %1426 = vmatpush2.msra.mxu0 0.0
  %1427 = vmatprep.subr.mxu0 0.0
  %1428 = vmatpush2.msra.mxu0 0.0
  %1429 = vmatprep.subr.mxu0 0.0
  %1430 = vmatpush2.msra.mxu0 0.0
  %1431 = vmatprep.subr.mxu0 0.0
  %1432 = vmatpush2.msra.mxu0 0.0
  %1433 = vmatprep.subr.mxu0 0.0
  %1434 = vmatpush2.msra.mxu0 0.0
  %1435 = vmatprep.subr.mxu0 0.0
  %1436 = vmatpush2.msra.mxu0 0.0
  %1437 = vmatprep.subr.mxu0 0.0
  %1438 = vmatpush2.msra.mxu0 0.0
  %1439 = vmatprep.mubr.f32.mxu0 0.0
  %1440 = vmatmul.mubr.f32.gmra.mxu0 %v1298
  %v1441 = vpop.f32.mrf.mxu0
  %v1442 = vadd.f32 0.0, %v1441
  %v1443 = vpop.f32.mrf.mxu0
  %v1444 = vadd.f32 0.0, %v1443
  %1445 = vdwg.mxu0
  %v1446 = vadd.f32 %v1300, %v1371
  %v1447 = vadd.f32 %v1301, %v1373
  %v1448 = vadd.f32 %v1302, %v1442
  %v1449 = vadd.f32 %v1303, %v1444
  %v1450 = vxor.u32 %v1446, 2147483648
  %v1451 = vmul.f32 %v1450, 1.442695
  %v1452 = vpow.pop %v1451
  %v1453 = vadd.f32 %v1452, 1.0
  %v1454 = vrcp.pop %v1453
  %v1455 = vmul.f32 1.0, %v1454
  %v1456 = vxor.u32 %v1447, 2147483648
  %v1457 = vmul.f32 %v1456, 1.442695
  %v1458 = vpow.pop %v1457
  %v1459 = vadd.f32 %v1458, 1.0
  %v1460 = vrcp.pop %v1459
  %v1461 = vmul.f32 1.0, %v1460
  %v1462 = vtanh.pop %v1448
  %v1463 = vxor.u32 %v1449, 2147483648
  %v1464 = vmul.f32 %v1463, 1.442695
  %v1465 = vpow.pop %v1464
  %v1466 = vadd.f32 %v1465, 1.0
  %v1467 = vrcp.pop %v1466
  %v1468 = vmul.f32 1.0, %v1467
  %v1469 = vmul.f32 %v1461, %v1296
  %v1470 = vmul.f32 %v1455, %v1462
  %v1471 = vadd.f32 %v1469, %v1470
  %v1472 = vtanh.pop %v1471
  %v1473 = vmul.f32 %v1468, %v1472
  %1474 = vst [vmem:[%s2] sm:$0xff] %v1473
  // Predicated region
  $region10: #{rnn_forward.1} parent=0 // pred_check
    _
  $region11: #{rnn_forward.1} parent=0 // pred_check_branch
    %1476 = sbr.rel (0) target = $region13
  $region12: #{rnn_forward.1} parent=0 // pred_region
    _
  $region13: #{rnn_forward.1} parent=0 // pred_fallthru
    _
  // Predicated region
  $region14: #{rnn_forward.1} parent=0 // pred_check
    _
  $region15: #{rnn_forward.1} parent=0 // pred_check_branch
    %1478 = sbr.rel (0) target = $region17
  $region16: #{rnn_forward.1} parent=0 // pred_region
    _
  $region17: #{rnn_forward.1} parent=0 // pred_fallthru
    _

</llo_original>
